<compile_context>
chip_gen: v7x
topology: tpu7x:2x2x1
jax: 0.10.0
libtpu: 0.0.40
codegen_flags: <defaults>
</compile_context>

<pallas_src>
import functools

import jax
import jax.numpy as jnp
from jax import lax
from jax.experimental import pallas as pl
from jax.experimental.pallas import tpu as pltpu


def _round_up(n, m):
    return (n + m - 1) // m * m


def _rel_attn_kernel(x_full_ref, x_q_ref, wqkv_ref, wproj_t_ref, bproj_ref,
                     bias_ref, o_ref, kv_scr, q_scr, cat_scr, *,
                     num_heads, head_dim, compute_dtype):
    """One (batch, query-tile) grid step.

    x_full_ref  : (1, Np, C)   full (padded) token block, consumed only at qi==0
    x_q_ref     : (1, tq, C)   query-tile token block
    wqkv_ref    : (3C, C)      fused QKV weight (compute dtype, q rows pre-scaled)
    wproj_t_ref : (C, C)       output projection weight, transposed (C_in, C_out)
    bproj_ref   : (1, C)       output projection bias (f32)
    bias_ref    : (H, tq, Np)  relative-position bias tile (bf16)
    o_ref       : (1, tq, C)   output tile
    kv_scr      : (2C, Np)     K^T / V^T for this batch element (channels-major)
    q_scr       : (C, tq)      Q^T for this query tile
    cat_scr     : (C, tq)      concat_h(attn_h @ v_h)^T for this query tile
    """
    qi = pl.program_id(1)
    C = num_heads * head_dim
    n_key = kv_scr.shape[1]

    # --- K^T / V^T: fused, full-C contraction, computed once per batch element.
    # kv_scr is carried across the qi axis -> qi must stay "arbitrary".
    @pl.when(qi == 0)
    def _():
        x_full = x_full_ref[0].astype(compute_dtype)            # (Np, C)
        w_kv = wqkv_ref[C:, :]                                  # (2C, C) static
        kv_t = lax.dot_general(w_kv, x_full, (((1,), (1,)), ((), ())),
                               preferred_element_type=jnp.float32)  # (2C, Np)
        kv_scr[...] = kv_t.astype(compute_dtype)

    # --- Q^T for this query tile (attention scale already folded into Wq rows).
    x_q = x_q_ref[0].astype(compute_dtype)                      # (tq, C)
    w_q = wqkv_ref[:C, :]                                       # (C, C) static
    q_t = lax.dot_general(w_q, x_q, (((1,), (1,)), ((), ())),
                          preferred_element_type=jnp.float32)   # (C, tq)
    q_scr[...] = q_t.astype(compute_dtype)

    ones_row = jnp.ones((1, n_key), dtype=compute_dtype)        # hoisted constant

    # --- Per-head attention: fully unrolled, static sublane offsets.
    for h in range(num_heads):
        q_off = h * head_dim
        v_off = C + h * head_dim
        q_h = q_scr[pl.ds(q_off, head_dim), :]                  # (hd, tq)
        k_h = kv_scr[pl.ds(q_off, head_dim), :]                 # (hd, Np)
        v_h = kv_scr[pl.ds(v_off, head_dim), :]                 # (hd, Np)

        # s[t, m] = q[t] . k[m]   (scale already folded into q)
        s = lax.dot_general(q_h, k_h, (((0,), (0,)), ((), ())),
                            preferred_element_type=jnp.float32)  # (tq, Np)
        s = s + bias_ref[h].astype(jnp.float32)

        # Numerically stable softmax; normalization deferred past attn@v.
        s_max = jnp.max(s, axis=-1, keepdims=True)
        p = jnp.exp(s - s_max)                                   # (tq, Np) f32
        p = p.astype(compute_dtype)

        # o^T[d, t] = sum_m v[m, d] * p[t, m]   (un-normalized)
        o_t = lax.dot_general(v_h, p, (((1,), (1,)), ((), ())),
                              preferred_element_type=jnp.float32)  # (hd, tq)
        # Row sums already lane-major: denom[0, t] = sum_m p[t, m].
        denom = lax.dot_general(ones_row, p, (((1,), (1,)), ((), ())),
                                preferred_element_type=jnp.float32)  # (1, tq)
        o_t = o_t * pl.reciprocal(denom, approx=True)            # (hd, tq)
        cat_scr[pl.ds(q_off, head_dim), :] = o_t.astype(compute_dtype)

    # --- Single lane-dense output projection over the concatenated heads.
    out = lax.dot_general(cat_scr[...], wproj_t_ref[...],
                          (((0,), (0,)), ((), ())),
                          preferred_element_type=jnp.float32)    # (tq, C)
    out = out + bproj_ref[...].astype(jnp.float32)
    o_ref[0] = out.astype(o_ref.dtype)


def _vmem_capacity_bytes():
    try:
        return int(pltpu.get_tpu_info().vmem_capacity_bytes)
    except Exception:
        return 64 * 1024 * 1024     # conservative (v7x per-TC VMEM)


def _footprint_bytes(tq, n_pad, c, n_heads, x_bytes, cd_bytes):
    bias = 2 * n_heads * tq * n_pad * 2            # bf16 bias, double-buffered
    x_full = n_pad * c * x_bytes                   # Buffered(1)
    x_q = 2 * tq * c * x_bytes
    out = 2 * tq * c * x_bytes
    wts = 4 * c * c * cd_bytes + 4 * c
    scr = (2 * c * n_pad + 2 * c * tq) * cd_bytes
    return bias + x_full + x_q + out + wts + scr


def relative_attention(x, wqkv_w, wproj_w, bproj, bias_B, *, num_heads,
                       qk_scale=None, q_block=None):
    """Pallas TPU forward of RelativeAttention (mask=None, eval mode).

    x       : (B, N, C)
    wqkv_w  : (3C, C)        = qkv.weight (PyTorch layout, qkv_bias=False)
    wproj_w : (C, C)         = proj.weight (PyTorch layout)
    bproj   : (C,)           = proj.bias
    bias_B  : (1, H, N, N)   = self.B
    """
    B, N, C = x.shape
    H = num_heads
    hd = C // H
    scale = qk_scale if qk_scale is not None else hd ** (-0.5)

    # bf16 MXU operands when the per-head scratch slices stay aligned with the
    # bf16 sublane tile (16); otherwise keep f32 scratch (still correct).
    compute_dtype = jnp.bfloat16 if hd % 16 == 0 else jnp.float32
    x_bytes = jnp.dtype(x.dtype).itemsize
    cd_bytes = jnp.dtype(compute_dtype).itemsize

    # Pad the token axis (lane-dense tiles); padded keys are masked through the
    # bias, padded query rows are dropped on output.
    N_pad = _round_up(N, 128) if N >= 128 else _round_up(N, 8)

    cap = _vmem_capacity_bytes()
    budget = int(cap * 0.6)
    cands = [c for c in (512, 256, 128, 64, 32, 16, 8)
             if c <= N_pad and N_pad % c == 0]
    if not cands:
        cands = [N_pad]
    if q_block is not None and N_pad % q_block == 0:
        tq = q_block
    else:
        tq = next((c for c in cands
                   if _footprint_bytes(c, N_pad, C, H, x_bytes, cd_bytes) <= budget),
                  cands[-1])
    n_qt = N_pad // tq

    vmem_limit = max(32 << 20,
                     int(_footprint_bytes(tq, N_pad, C, H, x_bytes, cd_bytes) * 1.3)
                     + (16 << 20))
    vmem_limit = min(vmem_limit, int(cap * 0.8))

    # One-time wrapper-side prep: fold the attention scale into the query rows,
    # transpose the projection weight, cast weights to the compute dtype and the
    # bias to bf16 (the bias is the dominant O(B*H*N^2) HBM stream).
    wqkv_scaled = jnp.asarray(wqkv_w, jnp.float32).at[:C, :].multiply(scale)
    wqkv_c = wqkv_scaled.astype(compute_dtype)                 # (3C, C)
    wproj_t = jnp.asarray(wproj_w, jnp.float32).T.astype(compute_dtype)
    bproj2 = jnp.asarray(bproj, jnp.float32).reshape(1, C)

    bias = jnp.asarray(bias_B, jnp.float32).reshape(H, N, N)
    x_p = x
    if N_pad != N:
        pad = N_pad - N
        x_p = jnp.pad(x, ((0, 0), (0, pad), (0, 0)))
        bias = jnp.pad(bias, ((0, 0), (0, pad), (0, pad)))
        key_ok = (jnp.arange(N_pad) < N)[None, None, :]
        bias = jnp.where(key_ok, bias, jnp.float32(-1e30))     # mask padded keys
    bias = bias.astype(jnp.bfloat16)

    kernel = functools.partial(_rel_attn_kernel, num_heads=H, head_dim=hd,
                               compute_dtype=compute_dtype)

    out = pl.pallas_call(
        kernel,
        out_shape=jax.ShapeDtypeStruct((B, N_pad, C), x.dtype),
        grid_spec=pltpu.PrefetchScalarGridSpec(
            num_scalar_prefetch=0,
            grid=(B, n_qt),
            in_specs=[
                # full (padded) token block: only consumed at qi == 0
                pl.BlockSpec((1, N_pad, C), lambda b, qi: (b, 0, 0),
                             pipeline_mode=pl.Buffered(1)),
                # per-tile query slice of x (normal pipelined stream)
                pl.BlockSpec((1, tq, C), lambda b, qi: (b, qi, 0)),
                # weights / bias: constant block index -> single-buffered
                pl.BlockSpec((3 * C, C), lambda b, qi: (0, 0),
                             pipeline_mode=pl.Buffered(1)),
                pl.BlockSpec((C, C), lambda b, qi: (0, 0),
                             pipeline_mode=pl.Buffered(1)),
                pl.BlockSpec((1, C), lambda b, qi: (0, 0),
                             pipeline_mode=pl.Buffered(1)),
                # relative-position bias, streamed per query tile (bf16)
                pl.BlockSpec((H, tq, N_pad), lambda b, qi: (0, qi, 0)),
            ],
            out_specs=pl.BlockSpec((1, tq, C), lambda b, qi: (b, qi, 0)),
            scratch_shapes=[
                pltpu.VMEM((2 * C, N_pad), compute_dtype),   # K^T / V^T
                pltpu.VMEM((C, tq), compute_dtype),          # Q^T
                pltpu.VMEM((C, tq), compute_dtype),          # concat(attn @ v)^T
            ],
        ),
        compiler_params=pltpu.CompilerParams(
            # qi carries kv_scr across iterations -> must stay "arbitrary".
            dimension_semantics=("parallel", "arbitrary"),
            vmem_limit_bytes=vmem_limit),
    )(x_p, x_p, wqkv_c, wproj_t, bproj2, bias)

    if N_pad != N:
        out = out[:, :N, :]
    return out


def relative_attention_ref(x, wqkv_w, wproj_w, bproj, bias_B, *, num_heads,
                           qk_scale=None):
    """Pure-JAX reference mirroring the PyTorch forward (mask=None, eval)."""
    B, N, C = x.shape
    H = num_heads
    hd = C // H
    scale = qk_scale if qk_scale is not None else hd ** (-0.5)

    qkv = x @ wqkv_w.T                                  # (B, N, 3C)
    qkv = qkv.reshape(B, N, 3, H, hd).transpose(2, 0, 3, 1, 4)
    q, k, v = qkv[0], qkv[1], qkv[2]                    # each (B, H, N, hd)
    attn = jnp.einsum("bhnd,bhmd->bhnm", q, k) * scale + bias_B
    attn = jax.nn.softmax(attn, axis=-1)
    out = jnp.einsum("bhnm,bhmd->bhnd", attn, v)        # (B, H, N, hd)
    out = out.transpose(0, 2, 1, 3).reshape(B, N, C)
    return out @ wproj_w.T + bproj


if __name__ == "__main__":
    def _run_case(B, N, C, H, case_id):
        key = jax.random.fold_in(jax.random.PRNGKey(0), case_id)
        kx, kqkv, kp, kbp, kb = jax.random.split(key, 5)
        x = jax.random.normal(kx, (B, N, C), dtype=jnp.float32)
        # nn.Linear(dim, 3*dim, bias=False): weight (3C, C) in PyTorch layout.
        wqkv_w = jax.random.normal(kqkv, (3 * C, C), dtype=jnp.float32) * 0.05
        # nn.Linear(dim, dim): weight (C, C) + bias (C,)
        wproj_w = jax.random.normal(kp, (C, C), dtype=jnp.float32) * 0.05
        bproj = jax.random.normal(kbp, (C,), dtype=jnp.float32) * 0.05
        # self.B = Parameter(randn(1, H, N, N))
        bias_B = jax.random.normal(kb, (1, H, N, N), dtype=jnp.float32)

        out = jax.block_until_ready(
            relative_attention(x, wqkv_w, wproj_w, bproj, bias_B, num_heads=H))
        ref = relative_attention_ref(x, wqkv_w, wproj_w, bproj, bias_B,
                                     num_heads=H)
        assert out.shape == (B, N, C)
        assert jnp.allclose(out, ref, atol=1e-2, rtol=1e-2), (
            f"mismatch vs JAX reference (B={B}, N={N}, C={C}, H={H})")

    _run_case(2, 8, 32, 4, 0)   # token count divisible by the tile
    _run_case(2, 9, 32, 4, 1)   # seq=9 (module default) -> padded / masked path
    print("KERNEL_OK")
</pallas_src>

<mosaic_0001>
module attributes {stable_mosaic.version = 11 : i64} {
  func.func @_rel_attn_kernel(%arg0: i32, %arg1: i32, %arg2: memref<1x8x32xf32, #tpu.memory_space<vmem>>, %arg3: memref<1x8x32xf32, #tpu.memory_space<vmem>>, %arg4: memref<96x32xf32, #tpu.memory_space<vmem>>, %arg5: memref<32x32xf32, #tpu.memory_space<vmem>>, %arg6: memref<1x32xf32, #tpu.memory_space<vmem>>, %arg7: memref<4x8x8xbf16, #tpu.memory_space<vmem>>, %arg8: memref<1x8x32xf32, #tpu.memory_space<vmem>>, %arg9: memref<64x8xf32, #tpu.memory_space<vmem>>, %arg10: memref<32x8xf32, #tpu.memory_space<vmem>>, %arg11: memref<32x8xf32, #tpu.memory_space<vmem>>) attributes {dimension_semantics = [#tpu.dimension_semantics<parallel>, #tpu.dimension_semantics<arbitrary>], iteration_bounds = array<i64: 2, 1>, scalar_prefetch = 0 : i64, scratch_operands = 3 : i64, tpu.core_type = #tpu.core_type<tc>, window_params = [{pipeline_mode = #tpu.pipeline_mode<synchronous>, transform_indices = @transform_0, window_bounds = array<i64: 1, 8, 32>}, {transform_indices = @transform_1, window_bounds = array<i64: 1, 8, 32>}, {pipeline_mode = #tpu.pipeline_mode<synchronous>, transform_indices = @transform_2, window_bounds = array<i64: 96, 32>}, {pipeline_mode = #tpu.pipeline_mode<synchronous>, transform_indices = @transform_3, window_bounds = array<i64: 32, 32>}, {pipeline_mode = #tpu.pipeline_mode<synchronous>, transform_indices = @transform_4, window_bounds = array<i64: 1, 32>}, {transform_indices = @transform_5, window_bounds = array<i64: 4, 8, 8>}, {transform_indices = @transform_6, window_bounds = array<i64: 1, 8, 32>}]} {
    %c0_i32 = arith.constant 0 : i32
    %0 = arith.cmpi eq, %arg1, %c0_i32 : i32
    %1 = arith.extui %0 : i1 to i32
    %c0_i32_0 = arith.constant 0 : i32
    %2 = arith.cmpi ne, %1, %c0_i32_0 : i32
    scf.if %2 {
      %c0_68 = arith.constant 0 : index
      %c0_69 = arith.constant 0 : index
      %c0_70 = arith.constant 0 : index
      %94 = vector.load %arg2[%c0_68, %c0_69, %c0_70] : memref<1x8x32xf32, #tpu.memory_space<vmem>>, vector<1x8x32xf32>
      %95 = vector.shape_cast %94 : vector<1x8x32xf32> to vector<8x32xf32>
      %c32_71 = arith.constant 32 : index
      %c0_72 = arith.constant 0 : index
      %96 = vector.load %arg4[%c32_71, %c0_72] : memref<96x32xf32, #tpu.memory_space<vmem>>, vector<64x32xf32>
      %cst_73 = arith.constant dense<0.000000e+00> : vector<64x8xf32>
      %97 = tpu.matmul %96, %95, %cst_73 {dimension_numbers = #tpu.dot_dimension_numbers<[1], [1], [0], [0], [0, 0, 1, 0], [], []>} : vector<64x32xf32>, vector<8x32xf32>, vector<64x8xf32> -> vector<64x8xf32>
      %c0_74 = arith.constant 0 : index
      %c0_75 = arith.constant 0 : index
      %98 = vector.load %arg9[%c0_74, %c0_75] : memref<64x8xf32, #tpu.memory_space<vmem>>, vector<64x8xf32>
      tpu.vector_store %arg9[%c0_74, %c0_75], %97 {strides = array<i32>} : memref<64x8xf32, #tpu.memory_space<vmem>>, vector<64x8xf32>,
    } else {
    }
    %c0 = arith.constant 0 : index
    %c0_1 = arith.constant 0 : index
    %c0_2 = arith.constant 0 : index
    %3 = vector.load %arg3[%c0, %c0_1, %c0_2] : memref<1x8x32xf32, #tpu.memory_space<vmem>>, vector<1x8x32xf32>
    %4 = vector.shape_cast %3 : vector<1x8x32xf32> to vector<8x32xf32>
    %c0_3 = arith.constant 0 : index
    %c0_4 = arith.constant 0 : index
    %5 = vector.load %arg4[%c0_3, %c0_4] : memref<96x32xf32, #tpu.memory_space<vmem>>, vector<32x32xf32>
    %cst = arith.constant dense<0.000000e+00> : vector<32x8xf32>
    %6 = tpu.matmul %5, %4, %cst {dimension_numbers = #tpu.dot_dimension_numbers<[1], [1], [0], [0], [0, 0, 1, 0], [], []>} : vector<32x32xf32>, vector<8x32xf32>, vector<32x8xf32> -> vector<32x8xf32>
    %c0_5 = arith.constant 0 : index
    %c0_6 = arith.constant 0 : index
    %7 = vector.load %arg10[%c0_5, %c0_6] : memref<32x8xf32, #tpu.memory_space<vmem>>, vector<32x8xf32>
    tpu.vector_store %arg10[%c0_5, %c0_6], %6 {strides = array<i32>} : memref<32x8xf32, #tpu.memory_space<vmem>>, vector<32x8xf32>,
    %cst_7 = arith.constant 1.000000e+00 : f32
    %8 = vector.broadcast %cst_7 : f32 to vector<1x8xf32>
    %c0_8 = arith.constant 0 : index
    %c0_9 = arith.constant 0 : index
    %9 = vector.load %arg10[%c0_8, %c0_9] : memref<32x8xf32, #tpu.memory_space<vmem>>, vector<8x8xf32>
    %c0_10 = arith.constant 0 : index
    %c0_11 = arith.constant 0 : index
    %10 = vector.load %arg9[%c0_10, %c0_11] : memref<64x8xf32, #tpu.memory_space<vmem>>, vector<8x8xf32>
    %c32 = arith.constant 32 : index
    %c0_12 = arith.constant 0 : index
    %11 = vector.load %arg9[%c32, %c0_12] : memref<64x8xf32, #tpu.memory_space<vmem>>, vector<8x8xf32>
    %cst_13 = arith.constant dense<0.000000e+00> : vector<8x8xf32>
    %12 = tpu.matmul %9, %10, %cst_13 {dimension_numbers = #tpu.dot_dimension_numbers<[0], [0], [1], [1], [0, 1, 1, 1], [], []>} : vector<8x8xf32>, vector<8x8xf32>, vector<8x8xf32> -> vector<8x8xf32>
    %c0_14 = arith.constant 0 : index
    %c0_15 = arith.constant 0 : index
    %c0_16 = arith.constant 0 : index
    %13 = vector.load %arg7[%c0_14, %c0_15, %c0_16] : memref<4x8x8xbf16, #tpu.memory_space<vmem>>, vector<1x8x8xbf16>
    %14 = vector.shape_cast %13 : vector<1x8x8xbf16> to vector<8x8xbf16>
    %15 = arith.extf %14 : vector<8x8xbf16> to vector<8x8xf32>
    %16 = arith.addf %12, %15 : vector<8x8xf32>
    %cst_17 = arith.constant dense<0xFF800000> : vector<8xf32>
    %17 = vector.multi_reduction <maximumf>, %16, %cst_17 [1] : vector<8x8xf32> to vector<8xf32>
    %18 = vector.shape_cast %17 : vector<8xf32> to vector<8x1xf32>
    %19 = vector.broadcast %18 : vector<8x1xf32> to vector<8x8xf32>
    %20 = arith.subf %16, %19 : vector<8x8xf32>
    %21 = math.exp %20 : vector<8x8xf32>
    %cst_18 = arith.constant dense<0.000000e+00> : vector<8x8xf32>
    %22 = tpu.matmul %11, %21, %cst_18 {dimension_numbers = #tpu.dot_dimension_numbers<[1], [1], [0], [0], [0, 0, 1, 0], [], []>} : vector<8x8xf32>, vector<8x8xf32>, vector<8x8xf32> -> vector<8x8xf32>
    %cst_19 = arith.constant dense<0.000000e+00> : vector<1x8xf32>
    %23 = tpu.matmul %8, %21, %cst_19 {dimension_numbers = #tpu.dot_dimension_numbers<[1], [1], [0], [0], [0, 0, 1, 0], [], []>} : vector<1x8xf32>, vector<8x8xf32>, vector<1x8xf32> -> vector<1x8xf32>
    %24 = tpu.reciprocal %23 {approx = true} : vector<1x8xf32> -> vector<1x8xf32>
    %25 = vector.broadcast %24 : vector<1x8xf32> to vector<8x8xf32>
    %26 = arith.mulf %22, %25 : vector<8x8xf32>
    %c0_20 = arith.constant 0 : index
    %c0_21 = arith.constant 0 : index
    %27 = vector.load %arg11[%c0_20, %c0_21] : memref<32x8xf32, #tpu.memory_space<vmem>>, vector<8x8xf32>
    tpu.vector_store %arg11[%c0_20, %c0_21], %26 {strides = array<i32>} : memref<32x8xf32, #tpu.memory_space<vmem>>, vector<8x8xf32>,
    %c8 = arith.constant 8 : index
    %c0_22 = arith.constant 0 : index
    %28 = vector.load %arg10[%c8, %c0_22] : memref<32x8xf32, #tpu.memory_space<vmem>>, vector<8x8xf32>
    %c8_23 = arith.constant 8 : index
    %c0_24 = arith.constant 0 : index
    %29 = vector.load %arg9[%c8_23, %c0_24] : memref<64x8xf32, #tpu.memory_space<vmem>>, vector<8x8xf32>
    %c40 = arith.constant 40 : index
    %c0_25 = arith.constant 0 : index
    %30 = vector.load %arg9[%c40, %c0_25] : memref<64x8xf32, #tpu.memory_space<vmem>>, vector<8x8xf32>
    %cst_26 = arith.constant dense<0.000000e+00> : vector<8x8xf32>
    %31 = tpu.matmul %28, %29, %cst_26 {dimension_numbers = #tpu.dot_dimension_numbers<[0], [0], [1], [1], [0, 1, 1, 1], [], []>} : vector<8x8xf32>, vector<8x8xf32>, vector<8x8xf32> -> vector<8x8xf32>
    %c1 = arith.constant 1 : index
    %c0_27 = arith.constant 0 : index
    %c0_28 = arith.constant 0 : index
    %32 = vector.load %arg7[%c1, %c0_27, %c0_28] : memref<4x8x8xbf16, #tpu.memory_space<vmem>>, vector<1x8x8xbf16>
    %33 = vector.shape_cast %32 : vector<1x8x8xbf16> to vector<8x8xbf16>
    %34 = arith.extf %33 : vector<8x8xbf16> to vector<8x8xf32>
    %35 = arith.addf %31, %34 : vector<8x8xf32>
    %cst_29 = arith.constant dense<0xFF800000> : vector<8xf32>
    %36 = vector.multi_reduction <maximumf>, %35, %cst_29 [1] : vector<8x8xf32> to vector<8xf32>
    %37 = vector.shape_cast %36 : vector<8xf32> to vector<8x1xf32>
    %38 = vector.broadcast %37 : vector<8x1xf32> to vector<8x8xf32>
    %39 = arith.subf %35, %38 : vector<8x8xf32>
    %40 = math.exp %39 : vector<8x8xf32>
    %cst_30 = arith.constant dense<0.000000e+00> : vector<8x8xf32>
    %41 = tpu.matmul %30, %40, %cst_30 {dimension_numbers = #tpu.dot_dimension_numbers<[1], [1], [0], [0], [0, 0, 1, 0], [], []>} : vector<8x8xf32>, vector<8x8xf32>, vector<8x8xf32> -> vector<8x8xf32>
    %cst_31 = arith.constant dense<0.000000e+00> : vector<1x8xf32>
    %42 = tpu.matmul %8, %40, %cst_31 {dimension_numbers = #tpu.dot_dimension_numbers<[1], [1], [0], [0], [0, 0, 1, 0], [], []>} : vector<1x8xf32>, vector<8x8xf32>, vector<1x8xf32> -> vector<1x8xf32>
    %43 = tpu.reciprocal %42 {approx = true} : vector<1x8xf32> -> vector<1x8xf32>
    %44 = vector.broadcast %43 : vector<1x8xf32> to vector<8x8xf32>
    %45 = arith.mulf %41, %44 : vector<8x8xf32>
    %c8_32 = arith.constant 8 : index
    %c0_33 = arith.constant 0 : index
    %46 = vector.load %arg11[%c8_32, %c0_33] : memref<32x8xf32, #tpu.memory_space<vmem>>, vector<8x8xf32>
    tpu.vector_store %arg11[%c8_32, %c0_33], %45 {strides = array<i32>} : memref<32x8xf32, #tpu.memory_space<vmem>>, vector<8x8xf32>,
    %c16 = arith.constant 16 : index
    %c0_34 = arith.constant 0 : index
    %47 = vector.load %arg10[%c16, %c0_34] : memref<32x8xf32, #tpu.memory_space<vmem>>, vector<8x8xf32>
    %c16_35 = arith.constant 16 : index
    %c0_36 = arith.constant 0 : index
    %48 = vector.load %arg9[%c16_35, %c0_36] : memref<64x8xf32, #tpu.memory_space<vmem>>, vector<8x8xf32>
    %c48 = arith.constant 48 : index
    %c0_37 = arith.constant 0 : index
    %49 = vector.load %arg9[%c48, %c0_37] : memref<64x8xf32, #tpu.memory_space<vmem>>, vector<8x8xf32>
    %cst_38 = arith.constant dense<0.000000e+00> : vector<8x8xf32>
    %50 = tpu.matmul %47, %48, %cst_38 {dimension_numbers = #tpu.dot_dimension_numbers<[0], [0], [1], [1], [0, 1, 1, 1], [], []>} : vector<8x8xf32>, vector<8x8xf32>, vector<8x8xf32> -> vector<8x8xf32>
    %c2 = arith.constant 2 : index
    %c0_39 = arith.constant 0 : index
    %c0_40 = arith.constant 0 : index
    %51 = vector.load %arg7[%c2, %c0_39, %c0_40] : memref<4x8x8xbf16, #tpu.memory_space<vmem>>, vector<1x8x8xbf16>
    %52 = vector.shape_cast %51 : vector<1x8x8xbf16> to vector<8x8xbf16>
    %53 = arith.extf %52 : vector<8x8xbf16> to vector<8x8xf32>
    %54 = arith.addf %50, %53 : vector<8x8xf32>
    %cst_41 = arith.constant dense<0xFF800000> : vector<8xf32>
    %55 = vector.multi_reduction <maximumf>, %54, %cst_41 [1] : vector<8x8xf32> to vector<8xf32>
    %56 = vector.shape_cast %55 : vector<8xf32> to vector<8x1xf32>
    %57 = vector.broadcast %56 : vector<8x1xf32> to vector<8x8xf32>
    %58 = arith.subf %54, %57 : vector<8x8xf32>
    %59 = math.exp %58 : vector<8x8xf32>
    %cst_42 = arith.constant dense<0.000000e+00> : vector<8x8xf32>
    %60 = tpu.matmul %49, %59, %cst_42 {dimension_numbers = #tpu.dot_dimension_numbers<[1], [1], [0], [0], [0, 0, 1, 0], [], []>} : vector<8x8xf32>, vector<8x8xf32>, vector<8x8xf32> -> vector<8x8xf32>
    %cst_43 = arith.constant dense<0.000000e+00> : vector<1x8xf32>
    %61 = tpu.matmul %8, %59, %cst_43 {dimension_numbers = #tpu.dot_dimension_numbers<[1], [1], [0], [0], [0, 0, 1, 0], [], []>} : vector<1x8xf32>, vector<8x8xf32>, vector<1x8xf32> -> vector<1x8xf32>
    %62 = tpu.reciprocal %61 {approx = true} : vector<1x8xf32> -> vector<1x8xf32>
    %63 = vector.broadcast %62 : vector<1x8xf32> to vector<8x8xf32>
    %64 = arith.mulf %60, %63 : vector<8x8xf32>
    %c16_44 = arith.constant 16 : index
    %c0_45 = arith.constant 0 : index
    %65 = vector.load %arg11[%c16_44, %c0_45] : memref<32x8xf32, #tpu.memory_space<vmem>>, vector<8x8xf32>
    tpu.vector_store %arg11[%c16_44, %c0_45], %64 {strides = array<i32>} : memref<32x8xf32, #tpu.memory_space<vmem>>, vector<8x8xf32>,
    %c24 = arith.constant 24 : index
    %c0_46 = arith.constant 0 : index
    %66 = vector.load %arg10[%c24, %c0_46] : memref<32x8xf32, #tpu.memory_space<vmem>>, vector<8x8xf32>
    %c24_47 = arith.constant 24 : index
    %c0_48 = arith.constant 0 : index
    %67 = vector.load %arg9[%c24_47, %c0_48] : memref<64x8xf32, #tpu.memory_space<vmem>>, vector<8x8xf32>
    %c56 = arith.constant 56 : index
    %c0_49 = arith.constant 0 : index
    %68 = vector.load %arg9[%c56, %c0_49] : memref<64x8xf32, #tpu.memory_space<vmem>>, vector<8x8xf32>
    %cst_50 = arith.constant dense<0.000000e+00> : vector<8x8xf32>
    %69 = tpu.matmul %66, %67, %cst_50 {dimension_numbers = #tpu.dot_dimension_numbers<[0], [0], [1], [1], [0, 1, 1, 1], [], []>} : vector<8x8xf32>, vector<8x8xf32>, vector<8x8xf32> -> vector<8x8xf32>
    %c3 = arith.constant 3 : index
    %c0_51 = arith.constant 0 : index
    %c0_52 = arith.constant 0 : index
    %70 = vector.load %arg7[%c3, %c0_51, %c0_52] : memref<4x8x8xbf16, #tpu.memory_space<vmem>>, vector<1x8x8xbf16>
    %71 = vector.shape_cast %70 : vector<1x8x8xbf16> to vector<8x8xbf16>
    %72 = arith.extf %71 : vector<8x8xbf16> to vector<8x8xf32>
    %73 = arith.addf %69, %72 : vector<8x8xf32>
    %cst_53 = arith.constant dense<0xFF800000> : vector<8xf32>
    %74 = vector.multi_reduction <maximumf>, %73, %cst_53 [1] : vector<8x8xf32> to vector<8xf32>
    %75 = vector.shape_cast %74 : vector<8xf32> to vector<8x1xf32>
    %76 = vector.broadcast %75 : vector<8x1xf32> to vector<8x8xf32>
    %77 = arith.subf %73, %76 : vector<8x8xf32>
    %78 = math.exp %77 : vector<8x8xf32>
    %cst_54 = arith.constant dense<0.000000e+00> : vector<8x8xf32>
    %79 = tpu.matmul %68, %78, %cst_54 {dimension_numbers = #tpu.dot_dimension_numbers<[1], [1], [0], [0], [0, 0, 1, 0], [], []>} : vector<8x8xf32>, vector<8x8xf32>, vector<8x8xf32> -> vector<8x8xf32>
    %cst_55 = arith.constant dense<0.000000e+00> : vector<1x8xf32>
    %80 = tpu.matmul %8, %78, %cst_55 {dimension_numbers = #tpu.dot_dimension_numbers<[1], [1], [0], [0], [0, 0, 1, 0], [], []>} : vector<1x8xf32>, vector<8x8xf32>, vector<1x8xf32> -> vector<1x8xf32>
    %81 = tpu.reciprocal %80 {approx = true} : vector<1x8xf32> -> vector<1x8xf32>
    %82 = vector.broadcast %81 : vector<1x8xf32> to vector<8x8xf32>
    %83 = arith.mulf %79, %82 : vector<8x8xf32>
    %c24_56 = arith.constant 24 : index
    %c0_57 = arith.constant 0 : index
    %84 = vector.load %arg11[%c24_56, %c0_57] : memref<32x8xf32, #tpu.memory_space<vmem>>, vector<8x8xf32>
    tpu.vector_store %arg11[%c24_56, %c0_57], %83 {strides = array<i32>} : memref<32x8xf32, #tpu.memory_space<vmem>>, vector<8x8xf32>,
    %c0_58 = arith.constant 0 : index
    %c0_59 = arith.constant 0 : index
    %85 = vector.load %arg11[%c0_58, %c0_59] : memref<32x8xf32, #tpu.memory_space<vmem>>, vector<32x8xf32>
    %c0_60 = arith.constant 0 : index
    %c0_61 = arith.constant 0 : index
    %86 = vector.load %arg5[%c0_60, %c0_61] : memref<32x32xf32, #tpu.memory_space<vmem>>, vector<32x32xf32>
    %cst_62 = arith.constant dense<0.000000e+00> : vector<8x32xf32>
    %87 = tpu.matmul %85, %86, %cst_62 {dimension_numbers = #tpu.dot_dimension_numbers<[0], [0], [1], [1], [0, 1, 1, 1], [], []>} : vector<32x8xf32>, vector<32x32xf32>, vector<8x32xf32> -> vector<8x32xf32>
    %c0_63 = arith.constant 0 : index
    %c0_64 = arith.constant 0 : index
    %88 = vector.load %arg6[%c0_63, %c0_64] : memref<1x32xf32, #tpu.memory_space<vmem>>, vector<1x32xf32>
    %89 = vector.broadcast %88 : vector<1x32xf32> to vector<8x32xf32>
    %90 = arith.addf %87, %89 : vector<8x32xf32>
    %c0_65 = arith.constant 0 : index
    %c0_66 = arith.constant 0 : index
    %c0_67 = arith.constant 0 : index
    %91 = vector.load %arg8[%c0_65, %c0_66, %c0_67] : memref<1x8x32xf32, #tpu.memory_space<vmem>>, vector<1x8x32xf32>
    %92 = vector.shape_cast %91 : vector<1x8x32xf32> to vector<8x32xf32>
    %93 = vector.shape_cast %90 : vector<8x32xf32> to vector<1x8x32xf32>
    tpu.vector_store %arg8[%c0_65, %c0_66, %c0_67], %93 {strides = array<i32>} : memref<1x8x32xf32, #tpu.memory_space<vmem>>, vector<1x8x32xf32>,
    return
  }
  func.func @transform_0(%arg0: i32, %arg1: i32) -> (i32, i32, i32) {
    %c0_i32 = arith.constant 0 : i32
    %c0_i32_0 = arith.constant 0 : i32
    %c0_i32_1 = arith.constant 0 : i32
    return %arg0, %c0_i32, %c0_i32_0 : i32, i32, i32
  }
  func.func @transform_1(%arg0: i32, %arg1: i32) -> (i32, i32, i32) {
    %c0_i32 = arith.constant 0 : i32
    %c0_i32_0 = arith.constant 0 : i32
    return %arg0, %arg1, %c0_i32 : i32, i32, i32
  }
  func.func @transform_2(%arg0: i32, %arg1: i32) -> (i32, i32) {
    %c0_i32 = arith.constant 0 : i32
    %c0_i32_0 = arith.constant 0 : i32
    %c0_i32_1 = arith.constant 0 : i32
    return %c0_i32, %c0_i32_0 : i32, i32
  }
  func.func @transform_3(%arg0: i32, %arg1: i32) -> (i32, i32) {
    %c0_i32 = arith.constant 0 : i32
    %c0_i32_0 = arith.constant 0 : i32
    %c0_i32_1 = arith.constant 0 : i32
    return %c0_i32, %c0_i32_0 : i32, i32
  }
  func.func @transform_4(%arg0: i32, %arg1: i32) -> (i32, i32) {
    %c0_i32 = arith.constant 0 : i32
    %c0_i32_0 = arith.constant 0 : i32
    %c0_i32_1 = arith.constant 0 : i32
    return %c0_i32, %c0_i32_0 : i32, i32
  }
  func.func @transform_5(%arg0: i32, %arg1: i32) -> (i32, i32, i32) {
    %c0_i32 = arith.constant 0 : i32
    %c0_i32_0 = arith.constant 0 : i32
    %c0_i32_1 = arith.constant 0 : i32
    return %c0_i32, %arg1, %c0_i32_0 : i32, i32, i32
  }
  func.func @transform_6(%arg0: i32, %arg1: i32) -> (i32, i32, i32) {
    %c0_i32 = arith.constant 0 : i32
    %c0_i32_0 = arith.constant 0 : i32
    return %arg0, %arg1, %c0_i32 : i32, i32, i32
  }
}

</mosaic_0001>

<llo_original>
// kernel: tpu_custom_call.1
$region0: #{tpu_custom_call.1}
  #allocation0 [shape = 'u32[]', space=smem, size = 0x4, offset = 0x4, fixed_abs, tag = 'smem constant byte address 0x4 - core index']
  #allocation1 [shape = 'u32[144,128]{1,0:T(1,128)}', space=vmem, size = 0x12000, scoped, tag = 'internal scratch']
  #allocation2 [shape = 'f32[64,8]{1,0:T(8,128)}', space=vmem, size = 0x8000, scoped, tag = 'scratch operand']
  #allocation3 [shape = 'f32[32,8]{1,0:T(8,128)}', space=vmem, size = 0x4000, scoped, tag = 'scratch operand']
  #allocation4 [shape = 'f32[32,8]{1,0:T(8,128)}', space=vmem, size = 0x4000, scoped, tag = 'scratch operand']
  %s0 = inlined_call_operand.vmem [shape: f32[2,8,32], index: 0, kind: input, shape index: {}]
  %s1 = inlined_call_operand.vmem [shape: f32[2,8,32], index: 1, kind: input, shape index: {}]
  %s2 = inlined_call_operand.vmem [shape: f32[96,32], index: 2, kind: input, shape index: {}]
  %s3 = inlined_call_operand.vmem [shape: f32[32,32], index: 3, kind: input, shape index: {}]
  %s4 = inlined_call_operand.vmem [shape: f32[1,32], index: 4, kind: input, shape index: {}]
  %s5 = inlined_call_operand.vmem [shape: bf16[4,8,8], index: 5, kind: input, shape index: {}]
  %s6 = inlined_call_operand.hbm [shape: f32[2,8,32], index: 6, kind: output, shape index: {}]
  %s7 = sld [smem:[#allocation0]]
  $region61: #{tpu_custom_call.1} parent=0
    _
  %s9 = ssub.s32 1, %s7
  %s10 = scalar_select 0, %s9, %s7
  $region1: #{tpu_custom_call.1} parent=0
    #allocation5 [shape = 'u8[8192]{0}', space=vmem, size = 0x2000, scoped, tag = 'output window, operand 0']
    #allocation6 [shape = 's32[2]{0}', space=sflag, size = 0x8, scoped, tag = 'scoped memory for tpu_custom_call.1']
    %11 = vsyncpa [#allocation6], 0
    %s12 = scalar_lea.sflag [#allocation6], 1
    %13 = vsyncpa %s12, 0
    loop: start=0, step=1, limit=4
    $region2: #{tpu_custom_call.1} parent=1 // loop_pre_header
      _
    $region3: #{tpu_custom_call.1} parent=1 // loop_header
      %s15 = sphi 0, %s19
      %p16 = scmp.ge.s32.totalorder %s15, 4
      %s22 = sphi 0, %s34
      %s23 = sphi 0, %s30
      %s24 = sphi 0, %s22
      %s25 = sphi 0, %s23
      %s26 = sphi 0, %s24
      %s27 = sphi 0, %s25
      %s37 = sphi 0, %s39
      %s40 = sphi 0, %s37
      %s41 = sphi 0, %s40
      %s57 = sphi 0, %s41
      %s65 = sphi 0, %s67
      %s68 = sphi 0, %s65
      %s69 = sphi 0, %s68
      %s85 = sphi 0, %s69
      %s89 = sphi 0, %s89
      %s91 = sphi 0, %s89
      %s92 = sphi 0, %s91
      %s106 = sphi 0, %s92
      %s110 = sphi 0, %s110
      %s112 = sphi 0, %s110
      %s113 = sphi 0, %s112
      %s127 = sphi 0, %s113
      %s131 = sphi 0, %s131
      %s133 = sphi 0, %s131
      %s134 = sphi 0, %s133
      %s148 = sphi 0, %s134
      %s154 = sphi 0, %s156
      %s157 = sphi 0, %s154
      %s158 = sphi 0, %s157
      %s174 = sphi 0, %s158
      %s182 = sphi 0, %s184
      %s185 = sphi 0, %s182
      %s186 = sphi 0, %s185
      %s202 = sphi 0, %s186
    $region4: #{tpu_custom_call.1} parent=1 // loop_header_branch
      %18 = sbr.rel (%p16) target = $region8
    $region5: #{tpu_custom_call.1} parent=1 // loop_body
      %s20 = ssub.s32 %s15, 1
      %s21 = ssub.s32 %s15, 2
      %s28 = sadd.s32 1, %s23
      %p29 = scmp.ge.s32.totalorder %s28, 1
      %s30 = scalar_select %p29, 0, %s28
      %s31 = sadd.s32 1, %s22
      %s32 = scalar_select %p29, %s31, %s22
      %p33 = scmp.ge.s32.totalorder %s32, 2
      %s34 = scalar_select %p33, 0, %s32
      %s35 = ssub.s32 %s22, %s34
      %p36 = scmp.eq.s32.totalorder %s35, 0
      %s38 = sadd.s32 %s37, 1
      %s39 = scalar_select %p36, %s37, %s38
      %p42 = pneg %p36
      %p43 = scmp.eq.s32.totalorder %s15, 1
      %p44 = por %p42, %p43
      %p45 = scmp.ne.s32.totalorder %s37, %s40
      %p46 = scmp.eq.s32.totalorder %s15, 0
      %p47 = por %p45, %p46
      %p48 = scmp.ne.s32.totalorder %s37, %s40
      %p49 = scmp.eq.s32.totalorder %s20, 1
      %p50 = por %p48, %p49
      %p51 = scmp.ne.s32.totalorder %s40, %s41
      %p52 = scmp.eq.s32.totalorder %s20, 0
      %p53 = por %p51, %p52
      %p54 = scmp.ne.s32.totalorder %s40, %s41
      %p55 = scmp.eq.s32.totalorder %s21, 1
      %p56 = por %p54, %p55
      %p58 = scmp.ne.s32.totalorder %s41, %s57
      %p59 = scmp.eq.s32.totalorder %s21, 0
      %p60 = por %p58, %p59
      %s61 = ssub.s32 %s22, %s34
      %s62 = ssub.s32 %s23, %s30
      %s63 = sor.u32 %s61, %s62
      %p64 = scmp.eq.s32.totalorder %s63, 0
      %s66 = sadd.s32 %s65, 1
      %s67 = scalar_select %p64, %s65, %s66
      %p70 = pneg %p64
      %p71 = scmp.eq.s32.totalorder %s15, 1
      %p72 = por %p70, %p71
      %p73 = scmp.ne.s32.totalorder %s65, %s68
      %p74 = scmp.eq.s32.totalorder %s15, 0
      %p75 = por %p73, %p74
      %p76 = scmp.ne.s32.totalorder %s65, %s68
      %p77 = scmp.eq.s32.totalorder %s20, 1
      %p78 = por %p76, %p77
      %p79 = scmp.ne.s32.totalorder %s68, %s69
      %p80 = scmp.eq.s32.totalorder %s20, 0
      %p81 = por %p79, %p80
      %p82 = scmp.ne.s32.totalorder %s68, %s69
      %p83 = scmp.eq.s32.totalorder %s21, 1
      %p84 = por %p82, %p83
      %p86 = scmp.ne.s32.totalorder %s69, %s85
      %p87 = scmp.eq.s32.totalorder %s21, 0
      %p88 = por %p86, %p87
      %s90 = sadd.s32 %s89, 1
      %p93 = scmp.eq.s32.totalorder %s15, 1
      %p94 = scmp.ne.s32.totalorder %s89, %s91
      %p95 = scmp.eq.s32.totalorder %s15, 0
      %p96 = por %p94, %p95
      %p97 = scmp.ne.s32.totalorder %s89, %s91
      %p98 = scmp.eq.s32.totalorder %s20, 1
      %p99 = por %p97, %p98
      %p100 = scmp.ne.s32.totalorder %s91, %s92
      %p101 = scmp.eq.s32.totalorder %s20, 0
      %p102 = por %p100, %p101
      %p103 = scmp.ne.s32.totalorder %s91, %s92
      %p104 = scmp.eq.s32.totalorder %s21, 1
      %p105 = por %p103, %p104
      %p107 = scmp.ne.s32.totalorder %s92, %s106
      %p108 = scmp.eq.s32.totalorder %s21, 0
      %p109 = por %p107, %p108
      %s111 = sadd.s32 %s110, 1
      %p114 = scmp.eq.s32.totalorder %s15, 1
      %p115 = scmp.ne.s32.totalorder %s110, %s112
      %p116 = scmp.eq.s32.totalorder %s15, 0
      %p117 = por %p115, %p116
      %p118 = scmp.ne.s32.totalorder %s110, %s112
      %p119 = scmp.eq.s32.totalorder %s20, 1
      %p120 = por %p118, %p119
      %p121 = scmp.ne.s32.totalorder %s112, %s113
      %p122 = scmp.eq.s32.totalorder %s20, 0
      %p123 = por %p121, %p122
      %p124 = scmp.ne.s32.totalorder %s112, %s113
      %p125 = scmp.eq.s32.totalorder %s21, 1
      %p126 = por %p124, %p125
      %p128 = scmp.ne.s32.totalorder %s113, %s127
      %p129 = scmp.eq.s32.totalorder %s21, 0
      %p130 = por %p128, %p129
      %s132 = sadd.s32 %s131, 1
      %p135 = scmp.eq.s32.totalorder %s15, 1
      %p136 = scmp.ne.s32.totalorder %s131, %s133
      %p137 = scmp.eq.s32.totalorder %s15, 0
      %p138 = por %p136, %p137
      %p139 = scmp.ne.s32.totalorder %s131, %s133
      %p140 = scmp.eq.s32.totalorder %s20, 1
      %p141 = por %p139, %p140
      %p142 = scmp.ne.s32.totalorder %s133, %s134
      %p143 = scmp.eq.s32.totalorder %s20, 0
      %p144 = por %p142, %p143
      %p145 = scmp.ne.s32.totalorder %s133, %s134
      %p146 = scmp.eq.s32.totalorder %s21, 1
      %p147 = por %p145, %p146
      %p149 = scmp.ne.s32.totalorder %s134, %s148
      %p150 = scmp.eq.s32.totalorder %s21, 0
      %p151 = por %p149, %p150
      %s152 = ssub.s32 %s23, %s30
      %p153 = scmp.eq.s32.totalorder %s152, 0
      %s155 = sadd.s32 %s154, 1
      %s156 = scalar_select %p153, %s154, %s155
      %p159 = pneg %p153
      %p160 = scmp.eq.s32.totalorder %s15, 1
      %p161 = por %p159, %p160
      %p162 = scmp.ne.s32.totalorder %s154, %s157
      %p163 = scmp.eq.s32.totalorder %s15, 0
      %p164 = por %p162, %p163
      %p165 = scmp.ne.s32.totalorder %s154, %s157
      %p166 = scmp.eq.s32.totalorder %s20, 1
      %p167 = por %p165, %p166
      %p168 = scmp.ne.s32.totalorder %s157, %s158
      %p169 = scmp.eq.s32.totalorder %s20, 0
      %p170 = por %p168, %p169
      %p171 = scmp.ne.s32.totalorder %s157, %s158
      %p172 = scmp.eq.s32.totalorder %s21, 1
      %p173 = por %p171, %p172
      %p175 = scmp.ne.s32.totalorder %s158, %s174
      %p176 = scmp.eq.s32.totalorder %s21, 0
      %p177 = por %p175, %p176
      %s178 = ssub.s32 %s22, %s34
      %s179 = ssub.s32 %s23, %s30
      %s180 = sor.u32 %s178, %s179
      %p181 = scmp.eq.s32.totalorder %s180, 0
      %s183 = sadd.s32 %s182, 1
      %s184 = scalar_select %p181, %s182, %s183
      %p187 = pneg %p181
      %p188 = scmp.eq.s32.totalorder %s15, 1
      %p189 = por %p187, %p188
      %p190 = scmp.ne.s32.totalorder %s182, %s185
      %p191 = scmp.eq.s32.totalorder %s15, 0
      %p192 = por %p190, %p191
      %p193 = scmp.ne.s32.totalorder %s182, %s185
      %p194 = scmp.eq.s32.totalorder %s20, 1
      %p195 = por %p193, %p194
      %p196 = scmp.ne.s32.totalorder %s185, %s186
      %p197 = scmp.eq.s32.totalorder %s20, 0
      %p198 = por %p196, %p197
      %p199 = scmp.ne.s32.totalorder %s185, %s186
      %p200 = scmp.eq.s32.totalorder %s21, 1
      %p201 = por %p199, %p200
      %p203 = scmp.ne.s32.totalorder %s186, %s202
      %p204 = scmp.eq.s32.totalorder %s21, 0
      %p205 = por %p203, %p204
      %p206 = scmp.le.s32.totalorder 1, %s15
      %p207 = scmp.lt.s32.totalorder %s15, 3
      %p208 = pnand %p206, %p207
      %p209 = pneg %p208
      // Predicated region
      $region9: #{tpu_custom_call.1} parent=5 // pred_check
        _
      $region10: #{tpu_custom_call.1} parent=5 // pred_check_branch
        %211 = sbr.rel (%p208) target = $region12
      $region11: #{tpu_custom_call.1} parent=5 // pred_region
        %s212 = ssub.s32 %s15, 1
        // Predicated region
        $region13: #{tpu_custom_call.1} parent=11 // pred_check
          %p213 = pneg %p53
        $region14: #{tpu_custom_call.1} parent=11 // pred_check_branch
          %215 = sbr.rel (%p213) target = $region16
        $region15: #{tpu_custom_call.1} parent=11 // pred_region
          %p216 = scmp.lt.s32.totalorder %s24, 1
          %s217 = scalar_select %p216, %s24, 1
          %s218 = smul.addr %s217, 8
          %s219 = scalar_lea.vmem %s0, %s218
        $region16: #{tpu_custom_call.1} parent=11 // pred_fallthru
          _
        // Predicated region
        $region17: #{tpu_custom_call.1} parent=11 // pred_check
          %p220 = pneg %p102
        $region18: #{tpu_custom_call.1} parent=11 // pred_check_branch
          %222 = sbr.rel (%p220) target = $region20
        $region19: #{tpu_custom_call.1} parent=11 // pred_region
          _
        $region20: #{tpu_custom_call.1} parent=11 // pred_fallthru
          _
        // Predicated region
        $region21: #{tpu_custom_call.1} parent=11 // pred_check
          %p223 = pneg %p123
        $region22: #{tpu_custom_call.1} parent=11 // pred_check_branch
          %225 = sbr.rel (%p223) target = $region24
        $region23: #{tpu_custom_call.1} parent=11 // pred_region
          _
        $region24: #{tpu_custom_call.1} parent=11 // pred_fallthru
          _
        // Predicated region
        $region25: #{tpu_custom_call.1} parent=11 // pred_check
          %p226 = pneg %p144
        $region26: #{tpu_custom_call.1} parent=11 // pred_check_branch
          %228 = sbr.rel (%p226) target = $region28
        $region27: #{tpu_custom_call.1} parent=11 // pred_region
          _
        $region28: #{tpu_custom_call.1} parent=11 // pred_fallthru
          _
        // Predicated region
        $region29: #{tpu_custom_call.1} parent=11 // pred_check
          %p229 = pneg %p170
        $region30: #{tpu_custom_call.1} parent=11 // pred_check_branch
          %231 = sbr.rel (%p229) target = $region32
        $region31: #{tpu_custom_call.1} parent=11 // pred_region
          %p232 = scmp.lt.s32.totalorder %s25, 0
          %s233 = scalar_select %p232, %s25, 0
          %s234 = smul.addr %s233, 4
          %s235 = scalar_lea.vmem %s5, %s234
        $region32: #{tpu_custom_call.1} parent=11 // pred_fallthru
          _
      $region12: #{tpu_custom_call.1} parent=5 // pred_fallthru
        _
      %p236 = scmp.lt.s32.totalorder %s15, 2
      // Predicated region
      $region33: #{tpu_custom_call.1} parent=5 // pred_check
        %p237 = pneg %p236
      $region34: #{tpu_custom_call.1} parent=5 // pred_check_branch
        %239 = sbr.rel (%p237) target = $region36
      $region35: #{tpu_custom_call.1} parent=5 // pred_region
        // Predicated region
        $region37: #{tpu_custom_call.1} parent=35 // pred_check
          %p240 = pneg %p75
        $region38: #{tpu_custom_call.1} parent=35 // pred_check_branch
          %242 = sbr.rel (%p240) target = $region40
        $region39: #{tpu_custom_call.1} parent=35 // pred_region
          %p243 = scmp.lt.s32.totalorder %s22, 1
          %s244 = scalar_select %p243, %s22, 1
          %p245 = scmp.lt.s32.totalorder %s23, 0
          %s246 = scalar_select %p245, %s23, 0
          %s247 = sadd.s32 %s246, %s244
          %s248 = smul.addr %s247, 8
          %s249 = scalar_lea.vmem %s1, %s248
        $region40: #{tpu_custom_call.1} parent=35 // pred_fallthru
          _
      $region36: #{tpu_custom_call.1} parent=5 // pred_fallthru
        _
      %p250 = scmp.le.s32.totalorder 1, %s15
      %p251 = scmp.lt.s32.totalorder %s15, 3
      %p252 = pnand %p250, %p251
      %p253 = pneg %p252
      // Predicated region
      $region41: #{tpu_custom_call.1} parent=5 // pred_check
        _
      $region42: #{tpu_custom_call.1} parent=5 // pred_check_branch
        %255 = sbr.rel (%p252) target = $region44
      $region43: #{tpu_custom_call.1} parent=5 // pred_region
        %s256 = ssub.s32 %s15, 1
        %p257 = scmp.lt.s32.totalorder %s24, 1
        %s258 = scalar_select %p257, %s24, 1
        %s259 = smul.addr %s258, 8
        %s260 = scalar_lea.vmem %s0, %s259
        %p261 = pneg %p53
        %p262 = pneg %p50
        %p263 = scmp.lt.s32.totalorder %s24, 1
        %s264 = scalar_select %p263, %s24, 1
        %p265 = scmp.lt.s32.totalorder %s25, 0
        %s266 = scalar_select %p265, %s25, 0
        %s267 = sadd.s32 %s266, %s264
        %s268 = smul.addr %s267, 8
        %s269 = scalar_lea.vmem %s1, %s268
        %p270 = pneg %p81
        %p271 = pneg %p78
        %p272 = pneg %p102
        %p273 = pneg %p99
        %p274 = pneg %p123
        %p275 = pneg %p120
        %p276 = pneg %p144
        %p277 = pneg %p141
        %p278 = scmp.lt.s32.totalorder %s25, 0
        %s279 = scalar_select %p278, %s25, 0
        %s280 = smul.addr %s279, 4
        %s281 = scalar_lea.vmem %s5, %s280
        %p282 = pneg %p170
        %p283 = pneg %p167
        %p284 = pneg %p198
        %p285 = pneg %p195
        %s286 = sand.u32 %s185, 1
        %s287 = scalar_lea.sflag [#allocation6], %s286
        %s288 = sand.u32 %s185, 1
        %s289 = smul.addr %s288, 8
        %s290 = scalar_lea.vmem [#allocation5], %s289
        %p291 = scmp.lt.s32.totalorder %s24, 1
        %s292 = scalar_select %p291, %s24, 1
        %s293 = smul.addr %s292, 8
        %s294 = scalar_lea.vmem %s0, %s293
        %p295 = scmp.lt.s32.totalorder %s24, 1
        %s296 = scalar_select %p295, %s24, 1
        %p297 = scmp.lt.s32.totalorder %s25, 0
        %s298 = scalar_select %p297, %s25, 0
        %s299 = sadd.s32 %s298, %s296
        %s300 = smul.addr %s299, 8
        %s301 = scalar_lea.vmem %s1, %s300
        %p302 = scmp.lt.s32.totalorder %s25, 0
        %s303 = scalar_select %p302, %s25, 0
        %s304 = smul.addr %s303, 4
        %s305 = scalar_lea.vmem %s5, %s304
        %p306 = scmp.eq.s32.totalorder %s25, 0
        // Predicated region
        $region45: #{tpu_custom_call.1} parent=43 // pred_check
          %p307 = pneg %p306
        $region46: #{tpu_custom_call.1} parent=43 // pred_check_branch
          %309 = sbr.rel (%p307) target = $region48
        $region47: #{tpu_custom_call.1} parent=43 // pred_region
          %v310 = vld [vmem:[%s294] sm:$0xff]
          %v311 = vld [vmem:[%s2 + $0x20] sm:$0xff]
          %v312 = vld [vmem:[%s2 + $0x28] sm:$0xff]
          %v313 = vld [vmem:[%s2 + $0x30] sm:$0xff]
          %v314 = vld [vmem:[%s2 + $0x38] sm:$0xff]
          %v315 = vld [vmem:[%s2 + $0x40] sm:$0xff]
          %v316 = vld [vmem:[%s2 + $0x48] sm:$0xff]
          %v317 = vld [vmem:[%s2 + $0x50] sm:$0xff]
          %v318 = vld [vmem:[%s2 + $0x58] sm:$0xff]
          %vm319 = vcmask 261120
          %v321 = vsel %vm319, %v311, 0
          %v324 = vsel %vm319, %v312, 0
          %v327 = vsel %vm319, %v313, 0
          %v330 = vsel %vm319, %v314, 0
          %v333 = vsel %vm319, %v315, 0
          %v336 = vsel %vm319, %v316, 0
          %v339 = vsel %vm319, %v317, 0
          %v342 = vsel %vm319, %v318, 0
          %v345 = vsel %vm319, %v310, 0
          %347 = vmatprep.subr.mxu0 0.0
          %348 = vmatpush1.xpose.msra.mxu0 %v345
          %349 = vmatprep.subr.mxu0 0.0
          %350 = vmatpush1.xpose.msra.mxu0 0.0
          %351 = vmatprep.subr.mxu0 0.0
          %352 = vmatpush1.xpose.msra.mxu0 0.0
          %353 = vmatprep.subr.mxu0 0.0
          %354 = vmatpush1.xpose.msra.mxu0 0.0
          %355 = vmatprep.subr.mxu0 0.0
          %356 = vmatpush1.xpose.msra.mxu0 0.0
          %357 = vmatprep.subr.mxu0 0.0
          %358 = vmatpush1.xpose.msra.mxu0 0.0
          %359 = vmatprep.subr.mxu0 0.0
          %360 = vmatpush1.xpose.msra.mxu0 0.0
          %361 = vmatprep.subr.mxu0 0.0
          %362 = vmatpush1.xpose.msra.mxu0 0.0
          %363 = vmatprep.subr.mxu0 0.0
          %364 = vmatpush1.xpose.msra.mxu0 0.0
          %365 = vmatprep.subr.mxu0 0.0
          %366 = vmatpush1.xpose.msra.mxu0 0.0
          %367 = vmatprep.subr.mxu0 0.0
          %368 = vmatpush1.xpose.msra.mxu0 0.0
          %369 = vmatprep.subr.mxu0 0.0
          %370 = vmatpush1.xpose.msra.mxu0 0.0
          %371 = vmatprep.subr.mxu0 0.0
          %372 = vmatpush1.xpose.msra.mxu0 0.0
          %373 = vmatprep.subr.mxu0 0.0
          %374 = vmatpush1.xpose.msra.mxu0 0.0
          %375 = vmatprep.subr.mxu0 0.0
          %376 = vmatpush1.xpose.msra.mxu0 0.0
          %377 = vmatprep.subr.mxu0 0.0
          %378 = vmatpush1.xpose.msra.mxu0 0.0
          %379 = vmatprep.subr.mxu0 0.0
          %380 = vmatpush1.xpose.msra.mxu0 0.0
          %381 = vmatprep.subr.mxu0 0.0
          %382 = vmatpush1.xpose.msra.mxu0 0.0
          %383 = vmatprep.subr.mxu0 0.0
          %384 = vmatpush1.xpose.msra.mxu0 0.0
          %385 = vmatprep.subr.mxu0 0.0
          %386 = vmatpush1.xpose.msra.mxu0 0.0
          %387 = vmatprep.subr.mxu0 0.0
          %388 = vmatpush1.xpose.msra.mxu0 0.0
          %389 = vmatprep.subr.mxu0 0.0
          %390 = vmatpush1.xpose.msra.mxu0 0.0
          %391 = vmatprep.subr.mxu0 0.0
          %392 = vmatpush1.xpose.msra.mxu0 0.0
          %393 = vmatprep.subr.mxu0 0.0
          %394 = vmatpush1.xpose.msra.mxu0 0.0
          %395 = vmatprep.subr.mxu0 0.0
          %396 = vmatpush1.xpose.msra.mxu0 0.0
          %397 = vmatprep.subr.mxu0 0.0
          %398 = vmatpush1.xpose.msra.mxu0 0.0
          %399 = vmatprep.subr.mxu0 0.0
          %400 = vmatpush1.xpose.msra.mxu0 0.0
          %401 = vmatprep.subr.mxu0 0.0
          %402 = vmatpush1.xpose.msra.mxu0 0.0
          %403 = vmatprep.subr.mxu0 0.0
          %404 = vmatpush1.xpose.msra.mxu0 0.0
          %405 = vmatprep.subr.mxu0 0.0
          %406 = vmatpush1.xpose.msra.mxu0 0.0
          %407 = vmatprep.subr.mxu0 0.0
          %408 = vmatpush1.xpose.msra.mxu0 0.0
          %409 = vmatprep.subr.mxu0 0.0
          %410 = vmatpush1.xpose.msra.mxu0 0.0
          %411 = vmatprep.mubr.f32.mxu0 0.0
          %412 = vmatmul.mubr.f32.gmra.mrb[0].mxu0 %v321
          %v413 = vpop.f32.mrb[0].mxu0
          %v414 = vadd.f32 0.0, %v413
          %v415 = vpop.f32.mrb[0].mxu0
          %416 = vmatprep.mubr.f32.mxu0 0.0
          %417 = vmatmul.mubr.f32.gmra.mrb[0].mxu0 %v324
          %v418 = vpop.f32.mrb[0].mxu0
          %v419 = vadd.f32 0.0, %v418
          %v420 = vpop.f32.mrb[0].mxu0
          %421 = vmatprep.mubr.f32.mxu0 0.0
          %422 = vmatmul.mubr.f32.gmra.mrb[0].mxu0 %v327
          %v423 = vpop.f32.mrb[0].mxu0
          %v424 = vadd.f32 0.0, %v423
          %v425 = vpop.f32.mrb[0].mxu0
          %426 = vmatprep.mubr.f32.mxu0 0.0
          %427 = vmatmul.mubr.f32.gmra.mrb[0].mxu0 %v330
          %v428 = vpop.f32.mrb[0].mxu0
          %v429 = vadd.f32 0.0, %v428
          %v430 = vpop.f32.mrb[0].mxu0
          %431 = vmatprep.mubr.f32.mxu0 0.0
          %432 = vmatmul.mubr.f32.gmra.mrb[0].mxu0 %v333
          %v433 = vpop.f32.mrb[0].mxu0
          %v434 = vadd.f32 0.0, %v433
          %v435 = vpop.f32.mrb[0].mxu0
          %436 = vmatprep.mubr.f32.mxu0 0.0
          %437 = vmatmul.mubr.f32.gmra.mrb[0].mxu0 %v336
          %v438 = vpop.f32.mrb[0].mxu0
          %v439 = vadd.f32 0.0, %v438
          %v440 = vpop.f32.mrb[0].mxu0
          %441 = vmatprep.mubr.f32.mxu0 0.0
          %442 = vmatmul.mubr.f32.gmra.mrb[0].mxu0 %v339
          %v443 = vpop.f32.mrb[0].mxu0
          %v444 = vadd.f32 0.0, %v443
          %v445 = vpop.f32.mrb[0].mxu0
          %446 = vmatprep.mubr.f32.mxu0 0.0
          %447 = vmatmul.mubr.f32.gmra.mrb[0].mxu0 %v342
          %v448 = vpop.f32.mrb[0].mxu0
          %v449 = vadd.f32 0.0, %v448
          %v450 = vpop.f32.mrb[0].mxu0
          %451 = vdwg.mxu0
          %vm452 = vcmask 64512
          %453 = vst.msk [vmem:[#allocation2] sm:$0xff] %vm452, %v414
          %454 = vst.msk [vmem:[#allocation2 + $0x8] sm:$0xff] %vm452, %v419
          %455 = vst.msk [vmem:[#allocation2 + $0x10] sm:$0xff] %vm452, %v424
          %456 = vst.msk [vmem:[#allocation2 + $0x18] sm:$0xff] %vm452, %v429
          %457 = vst.msk [vmem:[#allocation2 + $0x20] sm:$0xff] %vm452, %v434
          %458 = vst.msk [vmem:[#allocation2 + $0x28] sm:$0xff] %vm452, %v439
          %459 = vst.msk [vmem:[#allocation2 + $0x30] sm:$0xff] %vm452, %v444
          %460 = vst.msk [vmem:[#allocation2 + $0x38] sm:$0xff] %vm452, %v449
        $region48: #{tpu_custom_call.1} parent=43 // pred_fallthru
          _
        %v461 = vld [vmem:[%s301] sm:$0xff]
        %v462 = vld [vmem:[%s2] sm:$0xff]
        %v463 = vld [vmem:[%s2 + $0x8] sm:$0xff]
        %v464 = vld [vmem:[%s2 + $0x10] sm:$0xff]
        %v465 = vld [vmem:[%s2 + $0x18] sm:$0xff]
        %vm466 = vcmask 261120
        %v468 = vsel %vm466, %v462, 0
        %v471 = vsel %vm466, %v463, 0
        %v474 = vsel %vm466, %v464, 0
        %v477 = vsel %vm466, %v465, 0
        %v480 = vsel %vm466, %v461, 0
        %482 = vmatprep.subr.mxu0 0.0
        %483 = vmatpush1.xpose.msra.mxu0 %v480
        %484 = vmatprep.subr.mxu0 0.0
        %485 = vmatpush1.xpose.msra.mxu0 0.0
        %486 = vmatprep.subr.mxu0 0.0
        %487 = vmatpush1.xpose.msra.mxu0 0.0
        %488 = vmatprep.subr.mxu0 0.0
        %489 = vmatpush1.xpose.msra.mxu0 0.0
        %490 = vmatprep.subr.mxu0 0.0
        %491 = vmatpush1.xpose.msra.mxu0 0.0
        %492 = vmatprep.subr.mxu0 0.0
        %493 = vmatpush1.xpose.msra.mxu0 0.0
        %494 = vmatprep.subr.mxu0 0.0
        %495 = vmatpush1.xpose.msra.mxu0 0.0
        %496 = vmatprep.subr.mxu0 0.0
        %497 = vmatpush1.xpose.msra.mxu0 0.0
        %498 = vmatprep.subr.mxu0 0.0
        %499 = vmatpush1.xpose.msra.mxu0 0.0
        %500 = vmatprep.subr.mxu0 0.0
        %501 = vmatpush1.xpose.msra.mxu0 0.0
        %502 = vmatprep.subr.mxu0 0.0
        %503 = vmatpush1.xpose.msra.mxu0 0.0
        %504 = vmatprep.subr.mxu0 0.0
        %505 = vmatpush1.xpose.msra.mxu0 0.0
        %506 = vmatprep.subr.mxu0 0.0
        %507 = vmatpush1.xpose.msra.mxu0 0.0
        %508 = vmatprep.subr.mxu0 0.0
        %509 = vmatpush1.xpose.msra.mxu0 0.0
        %510 = vmatprep.subr.mxu0 0.0
        %511 = vmatpush1.xpose.msra.mxu0 0.0
        %512 = vmatprep.subr.mxu0 0.0
        %513 = vmatpush1.xpose.msra.mxu0 0.0
        %514 = vmatprep.subr.mxu0 0.0
        %515 = vmatpush1.xpose.msra.mxu0 0.0
        %516 = vmatprep.subr.mxu0 0.0
        %517 = vmatpush1.xpose.msra.mxu0 0.0
        %518 = vmatprep.subr.mxu0 0.0
        %519 = vmatpush1.xpose.msra.mxu0 0.0
        %520 = vmatprep.subr.mxu0 0.0
        %521 = vmatpush1.xpose.msra.mxu0 0.0
        %522 = vmatprep.subr.mxu0 0.0
        %523 = vmatpush1.xpose.msra.mxu0 0.0
        %524 = vmatprep.subr.mxu0 0.0
        %525 = vmatpush1.xpose.msra.mxu0 0.0
        %526 = vmatprep.subr.mxu0 0.0
        %527 = vmatpush1.xpose.msra.mxu0 0.0
        %528 = vmatprep.subr.mxu0 0.0
        %529 = vmatpush1.xpose.msra.mxu0 0.0
        %530 = vmatprep.subr.mxu0 0.0
        %531 = vmatpush1.xpose.msra.mxu0 0.0
        %532 = vmatprep.subr.mxu0 0.0
        %533 = vmatpush1.xpose.msra.mxu0 0.0
        %534 = vmatprep.subr.mxu0 0.0
        %535 = vmatpush1.xpose.msra.mxu0 0.0
        %536 = vmatprep.subr.mxu0 0.0
        %537 = vmatpush1.xpose.msra.mxu0 0.0
        %538 = vmatprep.subr.mxu0 0.0
        %539 = vmatpush1.xpose.msra.mxu0 0.0
        %540 = vmatprep.subr.mxu0 0.0
        %541 = vmatpush1.xpose.msra.mxu0 0.0
        %542 = vmatprep.subr.mxu0 0.0
        %543 = vmatpush1.xpose.msra.mxu0 0.0
        %544 = vmatprep.subr.mxu0 0.0
        %545 = vmatpush1.xpose.msra.mxu0 0.0
        %546 = vmatprep.mubr.f32.mxu0 0.0
        %547 = vmatmul.mubr.f32.gmra.mrb[0].mxu0 %v468
        %v548 = vpop.f32.mrb[0].mxu0
        %v549 = vadd.f32 0.0, %v548
        %v550 = vpop.f32.mrb[0].mxu0
        %551 = vmatprep.mubr.f32.mxu0 0.0
        %552 = vmatmul.mubr.f32.gmra.mrb[0].mxu0 %v471
        %v553 = vpop.f32.mrb[0].mxu0
        %v554 = vadd.f32 0.0, %v553
        %v555 = vpop.f32.mrb[0].mxu0
        %556 = vmatprep.mubr.f32.mxu0 0.0
        %557 = vmatmul.mubr.f32.gmra.mrb[0].mxu0 %v474
        %v558 = vpop.f32.mrb[0].mxu0
        %v559 = vadd.f32 0.0, %v558
        %v560 = vpop.f32.mrb[0].mxu0
        %561 = vmatprep.mubr.f32.mxu0 0.0
        %562 = vmatmul.mubr.f32.gmra.mrb[0].mxu0 %v477
        %v563 = vpop.f32.mrb[0].mxu0
        %v564 = vadd.f32 0.0, %v563
        %v565 = vpop.f32.mrb[0].mxu0
        %566 = vdwg.mxu0
        %vm567 = vcmask 64512
        %568 = vst.msk [vmem:[#allocation3] sm:$0xff] %vm567, %v549
        %569 = vst.msk [vmem:[#allocation3 + $0x8] sm:$0xff] %vm567, %v554
        %570 = vst.msk [vmem:[#allocation3 + $0x10] sm:$0xff] %vm567, %v559
        %571 = vst.msk [vmem:[#allocation3 + $0x18] sm:$0xff] %vm567, %v564
        %v572 = vld [vmem:[#allocation3] sm:$0xff]
        %v573 = vld [vmem:[#allocation2] sm:$0xff]
        %v574 = vld [vmem:[#allocation2 + $0x20] sm:$0xff]
        %v575 = vld [vmem:[%s305] sm:$0xf]
        %v576 = vunpack.c.l.bf16 %v575
        %577 = vxpose.xlu0.b32.start [1/16] %v572, 128
        %578 = vxpose.xlu0.b32.cont [2/16] 0.0, 128
        %579 = vxpose.xlu0.b32.cont [3/16] 0.0, 128
        %580 = vxpose.xlu0.b32.cont [4/16] 0.0, 128
        %581 = vxpose.xlu0.b32.cont [5/16] 0.0, 128
        %582 = vxpose.xlu0.b32.cont [6/16] 0.0, 128
        %583 = vxpose.xlu0.b32.cont [7/16] 0.0, 128
        %584 = vxpose.xlu0.b32.cont [8/16] 0.0, 128
        %585 = vxpose.xlu0.b32.cont [9/16] 0.0, 128
        %586 = vxpose.xlu0.b32.cont [10/16] 0.0, 128
        %587 = vxpose.xlu0.b32.cont [11/16] 0.0, 128
        %588 = vxpose.xlu0.b32.cont [12/16] 0.0, 128
        %589 = vxpose.xlu0.b32.cont [13/16] 0.0, 128
        %590 = vxpose.xlu0.b32.cont [14/16] 0.0, 128
        %591 = vxpose.xlu0.b32.cont [15/16] 0.0, 128
        %592 = vxpose.xlu0.b32.end [16/16] 0.0, 128
        %v593 = vpop.trf.xlu0
        %v594 = vpop.trf.xlu0
        %v595 = vpop.trf.xlu0
        %v596 = vpop.trf.xlu0
        %v597 = vpop.trf.xlu0
        %v598 = vpop.trf.xlu0
        %v599 = vpop.trf.xlu0
        %v600 = vpop.trf.xlu0
        %v601 = vpop.trf.xlu0
        %v602 = vpop.trf.xlu0
        %v603 = vpop.trf.xlu0
        %v604 = vpop.trf.xlu0
        %v605 = vpop.trf.xlu0
        %v606 = vpop.trf.xlu0
        %v607 = vpop.trf.xlu0
        %v608 = vpop.trf.xlu0
        %v610 = vsel %vm567, %v593, 0
        %612 = vmatprep.subr.mxu0 0.0
        %613 = vmatpush1.msra.mxu0 %v573
        %614 = vmatprep.subr.mxu0 0.0
        %615 = vmatpush1.msra.mxu0 0.0
        %616 = vmatprep.subr.mxu0 0.0
        %617 = vmatpush1.msra.mxu0 0.0
        %618 = vmatprep.subr.mxu0 0.0
        %619 = vmatpush1.msra.mxu0 0.0
        %620 = vmatprep.subr.mxu0 0.0
        %621 = vmatpush1.msra.mxu0 0.0
        %622 = vmatprep.subr.mxu0 0.0
        %623 = vmatpush1.msra.mxu0 0.0
        %624 = vmatprep.subr.mxu0 0.0
        %625 = vmatpush1.msra.mxu0 0.0
        %626 = vmatprep.subr.mxu0 0.0
        %627 = vmatpush1.msra.mxu0 0.0
        %628 = vmatprep.subr.mxu0 0.0
        %629 = vmatpush1.msra.mxu0 0.0
        %630 = vmatprep.subr.mxu0 0.0
        %631 = vmatpush1.msra.mxu0 0.0
        %632 = vmatprep.subr.mxu0 0.0
        %633 = vmatpush1.msra.mxu0 0.0
        %634 = vmatprep.subr.mxu0 0.0
        %635 = vmatpush1.msra.mxu0 0.0
        %636 = vmatprep.subr.mxu0 0.0
        %637 = vmatpush1.msra.mxu0 0.0
        %638 = vmatprep.subr.mxu0 0.0
        %639 = vmatpush1.msra.mxu0 0.0
        %640 = vmatprep.subr.mxu0 0.0
        %641 = vmatpush1.msra.mxu0 0.0
        %642 = vmatprep.subr.mxu0 0.0
        %643 = vmatpush1.msra.mxu0 0.0
        %644 = vmatprep.subr.mxu0 0.0
        %645 = vmatpush1.msra.mxu0 0.0
        %646 = vmatprep.subr.mxu0 0.0
        %647 = vmatpush1.msra.mxu0 0.0
        %648 = vmatprep.subr.mxu0 0.0
        %649 = vmatpush1.msra.mxu0 0.0
        %650 = vmatprep.subr.mxu0 0.0
        %651 = vmatpush1.msra.mxu0 0.0
        %652 = vmatprep.subr.mxu0 0.0
        %653 = vmatpush1.msra.mxu0 0.0
        %654 = vmatprep.subr.mxu0 0.0
        %655 = vmatpush1.msra.mxu0 0.0
        %656 = vmatprep.subr.mxu0 0.0
        %657 = vmatpush1.msra.mxu0 0.0
        %658 = vmatprep.subr.mxu0 0.0
        %659 = vmatpush1.msra.mxu0 0.0
        %660 = vmatprep.subr.mxu0 0.0
        %661 = vmatpush1.msra.mxu0 0.0
        %662 = vmatprep.subr.mxu0 0.0
        %663 = vmatpush1.msra.mxu0 0.0
        %664 = vmatprep.subr.mxu0 0.0
        %665 = vmatpush1.msra.mxu0 0.0
        %666 = vmatprep.subr.mxu0 0.0
        %667 = vmatpush1.msra.mxu0 0.0
        %668 = vmatprep.subr.mxu0 0.0
        %669 = vmatpush1.msra.mxu0 0.0
        %670 = vmatprep.subr.mxu0 0.0
        %671 = vmatpush1.msra.mxu0 0.0
        %672 = vmatprep.subr.mxu0 0.0
        %673 = vmatpush1.msra.mxu0 0.0
        %674 = vmatprep.subr.mxu0 0.0
        %675 = vmatpush1.msra.mxu0 0.0
        %676 = vmatprep.mubr.f32.mxu0 0.0
        %677 = vmatmul.mubr.f32.gmra.mrb[0].mxu0 %v610
        %v678 = vpop.f32.mrb[0].mxu0
        %v679 = vadd.f32 %v576, %v678
        %v680 = vpop.f32.mrb[0].mxu0
        %681 = vdwg.mxu0
        %v682 = vsel %vm567, %v679, -inf
        %683 = vmax.xlane.f32.xlu0 %v682
        %v684 = vpop.xlane.xlu0 %683
        %v685 = vsub.f32 %v679, %v684
        %v686 = vmul.f32 %v685, 1.442695
        %v687 = vpow.pop %v686
        %v689 = vsel %vm567, %v574, 0
        %v692 = vsel %vm567, %v687, 0
        %694 = vmatprep.subr.mxu0 0.0
        %695 = vmatpush1.xpose.msra.mxu0 %v692
        %696 = vmatprep.subr.mxu0 0.0
        %697 = vmatpush1.xpose.msra.mxu0 0.0
        %698 = vmatprep.subr.mxu0 0.0
        %699 = vmatpush1.xpose.msra.mxu0 0.0
        %700 = vmatprep.subr.mxu0 0.0
        %701 = vmatpush1.xpose.msra.mxu0 0.0
        %702 = vmatprep.subr.mxu0 0.0
        %703 = vmatpush1.xpose.msra.mxu0 0.0
        %704 = vmatprep.subr.mxu0 0.0
        %705 = vmatpush1.xpose.msra.mxu0 0.0
        %706 = vmatprep.subr.mxu0 0.0
        %707 = vmatpush1.xpose.msra.mxu0 0.0
        %708 = vmatprep.subr.mxu0 0.0
        %709 = vmatpush1.xpose.msra.mxu0 0.0
        %710 = vmatprep.subr.mxu0 0.0
        %711 = vmatpush1.xpose.msra.mxu0 0.0
        %712 = vmatprep.subr.mxu0 0.0
        %713 = vmatpush1.xpose.msra.mxu0 0.0
        %714 = vmatprep.subr.mxu0 0.0
        %715 = vmatpush1.xpose.msra.mxu0 0.0
        %716 = vmatprep.subr.mxu0 0.0
        %717 = vmatpush1.xpose.msra.mxu0 0.0
        %718 = vmatprep.subr.mxu0 0.0
        %719 = vmatpush1.xpose.msra.mxu0 0.0
        %720 = vmatprep.subr.mxu0 0.0
        %721 = vmatpush1.xpose.msra.mxu0 0.0
        %722 = vmatprep.subr.mxu0 0.0
        %723 = vmatpush1.xpose.msra.mxu0 0.0
        %724 = vmatprep.subr.mxu0 0.0
        %725 = vmatpush1.xpose.msra.mxu0 0.0
        %726 = vmatprep.subr.mxu0 0.0
        %727 = vmatpush1.xpose.msra.mxu0 0.0
        %728 = vmatprep.subr.mxu0 0.0
        %729 = vmatpush1.xpose.msra.mxu0 0.0
        %730 = vmatprep.subr.mxu0 0.0
        %731 = vmatpush1.xpose.msra.mxu0 0.0
        %732 = vmatprep.subr.mxu0 0.0
        %733 = vmatpush1.xpose.msra.mxu0 0.0
        %734 = vmatprep.subr.mxu0 0.0
        %735 = vmatpush1.xpose.msra.mxu0 0.0
        %736 = vmatprep.subr.mxu0 0.0
        %737 = vmatpush1.xpose.msra.mxu0 0.0
        %738 = vmatprep.subr.mxu0 0.0
        %739 = vmatpush1.xpose.msra.mxu0 0.0
        %740 = vmatprep.subr.mxu0 0.0
        %741 = vmatpush1.xpose.msra.mxu0 0.0
        %742 = vmatprep.subr.mxu0 0.0
        %743 = vmatpush1.xpose.msra.mxu0 0.0
        %744 = vmatprep.subr.mxu0 0.0
        %745 = vmatpush1.xpose.msra.mxu0 0.0
        %746 = vmatprep.subr.mxu0 0.0
        %747 = vmatpush1.xpose.msra.mxu0 0.0
        %748 = vmatprep.subr.mxu0 0.0
        %749 = vmatpush1.xpose.msra.mxu0 0.0
        %750 = vmatprep.subr.mxu0 0.0
        %751 = vmatpush1.xpose.msra.mxu0 0.0
        %752 = vmatprep.subr.mxu0 0.0
        %753 = vmatpush1.xpose.msra.mxu0 0.0
        %754 = vmatprep.subr.mxu0 0.0
        %755 = vmatpush1.xpose.msra.mxu0 0.0
        %756 = vmatprep.subr.mxu0 0.0
        %757 = vmatpush1.xpose.msra.mxu0 0.0
        %758 = vmatprep.mubr.f32.mxu0 0.0
        %759 = vmatmul.mubr.f32.gmra.mrb[0].mxu0 %v689
        %v760 = vpop.f32.mrb[0].mxu0
        %v761 = vadd.f32 0.0, %v760
        %v762 = vpop.f32.mrb[0].mxu0
        %763 = vdwg.mxu0
        %v765 = vsel %vm567, 1.0, 0
        %767 = vmatprep.subr.mxu0 0.0
        %768 = vmatpush1.xpose.msra.mxu0 %v692
        %769 = vmatprep.subr.mxu0 0.0
        %770 = vmatpush1.xpose.msra.mxu0 0.0
        %771 = vmatprep.subr.mxu0 0.0
        %772 = vmatpush1.xpose.msra.mxu0 0.0
        %773 = vmatprep.subr.mxu0 0.0
        %774 = vmatpush1.xpose.msra.mxu0 0.0
        %775 = vmatprep.subr.mxu0 0.0
        %776 = vmatpush1.xpose.msra.mxu0 0.0
        %777 = vmatprep.subr.mxu0 0.0
        %778 = vmatpush1.xpose.msra.mxu0 0.0
        %779 = vmatprep.subr.mxu0 0.0
        %780 = vmatpush1.xpose.msra.mxu0 0.0
        %781 = vmatprep.subr.mxu0 0.0
        %782 = vmatpush1.xpose.msra.mxu0 0.0
        %783 = vmatprep.subr.mxu0 0.0
        %784 = vmatpush1.xpose.msra.mxu0 0.0
        %785 = vmatprep.subr.mxu0 0.0
        %786 = vmatpush1.xpose.msra.mxu0 0.0
        %787 = vmatprep.subr.mxu0 0.0
        %788 = vmatpush1.xpose.msra.mxu0 0.0
        %789 = vmatprep.subr.mxu0 0.0
        %790 = vmatpush1.xpose.msra.mxu0 0.0
        %791 = vmatprep.subr.mxu0 0.0
        %792 = vmatpush1.xpose.msra.mxu0 0.0
        %793 = vmatprep.subr.mxu0 0.0
        %794 = vmatpush1.xpose.msra.mxu0 0.0
        %795 = vmatprep.subr.mxu0 0.0
        %796 = vmatpush1.xpose.msra.mxu0 0.0
        %797 = vmatprep.subr.mxu0 0.0
        %798 = vmatpush1.xpose.msra.mxu0 0.0
        %799 = vmatprep.subr.mxu0 0.0
        %800 = vmatpush1.xpose.msra.mxu0 0.0
        %801 = vmatprep.subr.mxu0 0.0
        %802 = vmatpush1.xpose.msra.mxu0 0.0
        %803 = vmatprep.subr.mxu0 0.0
        %804 = vmatpush1.xpose.msra.mxu0 0.0
        %805 = vmatprep.subr.mxu0 0.0
        %806 = vmatpush1.xpose.msra.mxu0 0.0
        %807 = vmatprep.subr.mxu0 0.0
        %808 = vmatpush1.xpose.msra.mxu0 0.0
        %809 = vmatprep.subr.mxu0 0.0
        %810 = vmatpush1.xpose.msra.mxu0 0.0
        %811 = vmatprep.subr.mxu0 0.0
        %812 = vmatpush1.xpose.msra.mxu0 0.0
        %813 = vmatprep.subr.mxu0 0.0
        %814 = vmatpush1.xpose.msra.mxu0 0.0
        %815 = vmatprep.subr.mxu0 0.0
        %816 = vmatpush1.xpose.msra.mxu0 0.0
        %817 = vmatprep.subr.mxu0 0.0
        %818 = vmatpush1.xpose.msra.mxu0 0.0
        %819 = vmatprep.subr.mxu0 0.0
        %820 = vmatpush1.xpose.msra.mxu0 0.0
        %821 = vmatprep.subr.mxu0 0.0
        %822 = vmatpush1.xpose.msra.mxu0 0.0
        %823 = vmatprep.subr.mxu0 0.0
        %824 = vmatpush1.xpose.msra.mxu0 0.0
        %825 = vmatprep.subr.mxu0 0.0
        %826 = vmatpush1.xpose.msra.mxu0 0.0
        %827 = vmatprep.subr.mxu0 0.0
        %828 = vmatpush1.xpose.msra.mxu0 0.0
        %829 = vmatprep.subr.mxu0 0.0
        %830 = vmatpush1.xpose.msra.mxu0 0.0
        %831 = vmatprep.mubr.f32.mxu0 0.0
        %832 = vmatmul.mubr.f32.gmra.mrb[0].mxu0 %v765
        %v833 = vpop.f32.mrb[0].mxu0
        %v834 = vadd.f32 0.0, %v833
        %v835 = vpop.f32.mrb[0].mxu0
        %836 = vdwg.mxu0
        %v837 = vrcp.pop %v834
        %v838 = vlaneseq
        %v839 = vshrl.u32 %v838, 7
        %v840 = vsub.s32 0, %v839
        %v841 = vrot.slane %v837, %v840
        %v842 = vmul.f32 %v761, %v841
        %843 = vst.msk [vmem:[#allocation4] sm:$0xff] %vm567, %v842
        %v844 = vld [vmem:[#allocation3 + $0x8] sm:$0xff]
        %v845 = vld [vmem:[#allocation2 + $0x8] sm:$0xff]
        %v846 = vld [vmem:[#allocation2 + $0x28] sm:$0xff]
        %s847 = scalar_lea.vmem %s305, 4
        %v848 = vld [vmem:[%s847] sm:$0xf]
        %v849 = vunpack.c.l.bf16 %v848
        %850 = vxpose.xlu0.b32.start [1/16] %v844, 128
        %851 = vxpose.xlu0.b32.cont [2/16] 0.0, 128
        %852 = vxpose.xlu0.b32.cont [3/16] 0.0, 128
        %853 = vxpose.xlu0.b32.cont [4/16] 0.0, 128
        %854 = vxpose.xlu0.b32.cont [5/16] 0.0, 128
        %855 = vxpose.xlu0.b32.cont [6/16] 0.0, 128
        %856 = vxpose.xlu0.b32.cont [7/16] 0.0, 128
        %857 = vxpose.xlu0.b32.cont [8/16] 0.0, 128
        %858 = vxpose.xlu0.b32.cont [9/16] 0.0, 128
        %859 = vxpose.xlu0.b32.cont [10/16] 0.0, 128
        %860 = vxpose.xlu0.b32.cont [11/16] 0.0, 128
        %861 = vxpose.xlu0.b32.cont [12/16] 0.0, 128
        %862 = vxpose.xlu0.b32.cont [13/16] 0.0, 128
        %863 = vxpose.xlu0.b32.cont [14/16] 0.0, 128
        %864 = vxpose.xlu0.b32.cont [15/16] 0.0, 128
        %865 = vxpose.xlu0.b32.end [16/16] 0.0, 128
        %v866 = vpop.trf.xlu0
        %v867 = vpop.trf.xlu0
        %v868 = vpop.trf.xlu0
        %v869 = vpop.trf.xlu0
        %v870 = vpop.trf.xlu0
        %v871 = vpop.trf.xlu0
        %v872 = vpop.trf.xlu0
        %v873 = vpop.trf.xlu0
        %v874 = vpop.trf.xlu0
        %v875 = vpop.trf.xlu0
        %v876 = vpop.trf.xlu0
        %v877 = vpop.trf.xlu0
        %v878 = vpop.trf.xlu0
        %v879 = vpop.trf.xlu0
        %v880 = vpop.trf.xlu0
        %v881 = vpop.trf.xlu0
        %v883 = vsel %vm567, %v866, 0
        %885 = vmatprep.subr.mxu0 0.0
        %886 = vmatpush1.msra.mxu0 %v845
        %887 = vmatprep.subr.mxu0 0.0
        %888 = vmatpush1.msra.mxu0 0.0
        %889 = vmatprep.subr.mxu0 0.0
        %890 = vmatpush1.msra.mxu0 0.0
        %891 = vmatprep.subr.mxu0 0.0
        %892 = vmatpush1.msra.mxu0 0.0
        %893 = vmatprep.subr.mxu0 0.0
        %894 = vmatpush1.msra.mxu0 0.0
        %895 = vmatprep.subr.mxu0 0.0
        %896 = vmatpush1.msra.mxu0 0.0
        %897 = vmatprep.subr.mxu0 0.0
        %898 = vmatpush1.msra.mxu0 0.0
        %899 = vmatprep.subr.mxu0 0.0
        %900 = vmatpush1.msra.mxu0 0.0
        %901 = vmatprep.subr.mxu0 0.0
        %902 = vmatpush1.msra.mxu0 0.0
        %903 = vmatprep.subr.mxu0 0.0
        %904 = vmatpush1.msra.mxu0 0.0
        %905 = vmatprep.subr.mxu0 0.0
        %906 = vmatpush1.msra.mxu0 0.0
        %907 = vmatprep.subr.mxu0 0.0
        %908 = vmatpush1.msra.mxu0 0.0
        %909 = vmatprep.subr.mxu0 0.0
        %910 = vmatpush1.msra.mxu0 0.0
        %911 = vmatprep.subr.mxu0 0.0
        %912 = vmatpush1.msra.mxu0 0.0
        %913 = vmatprep.subr.mxu0 0.0
        %914 = vmatpush1.msra.mxu0 0.0
        %915 = vmatprep.subr.mxu0 0.0
        %916 = vmatpush1.msra.mxu0 0.0
        %917 = vmatprep.subr.mxu0 0.0
        %918 = vmatpush1.msra.mxu0 0.0
        %919 = vmatprep.subr.mxu0 0.0
        %920 = vmatpush1.msra.mxu0 0.0
        %921 = vmatprep.subr.mxu0 0.0
        %922 = vmatpush1.msra.mxu0 0.0
        %923 = vmatprep.subr.mxu0 0.0
        %924 = vmatpush1.msra.mxu0 0.0
        %925 = vmatprep.subr.mxu0 0.0
        %926 = vmatpush1.msra.mxu0 0.0
        %927 = vmatprep.subr.mxu0 0.0
        %928 = vmatpush1.msra.mxu0 0.0
        %929 = vmatprep.subr.mxu0 0.0
        %930 = vmatpush1.msra.mxu0 0.0
        %931 = vmatprep.subr.mxu0 0.0
        %932 = vmatpush1.msra.mxu0 0.0
        %933 = vmatprep.subr.mxu0 0.0
        %934 = vmatpush1.msra.mxu0 0.0
        %935 = vmatprep.subr.mxu0 0.0
        %936 = vmatpush1.msra.mxu0 0.0
        %937 = vmatprep.subr.mxu0 0.0
        %938 = vmatpush1.msra.mxu0 0.0
        %939 = vmatprep.subr.mxu0 0.0
        %940 = vmatpush1.msra.mxu0 0.0
        %941 = vmatprep.subr.mxu0 0.0
        %942 = vmatpush1.msra.mxu0 0.0
        %943 = vmatprep.subr.mxu0 0.0
        %944 = vmatpush1.msra.mxu0 0.0
        %945 = vmatprep.subr.mxu0 0.0
        %946 = vmatpush1.msra.mxu0 0.0
        %947 = vmatprep.subr.mxu0 0.0
        %948 = vmatpush1.msra.mxu0 0.0
        %949 = vmatprep.mubr.f32.mxu0 0.0
        %950 = vmatmul.mubr.f32.gmra.mrb[0].mxu0 %v883
        %v951 = vpop.f32.mrb[0].mxu0
        %v952 = vadd.f32 %v849, %v951
        %v953 = vpop.f32.mrb[0].mxu0
        %954 = vdwg.mxu0
        %v955 = vsel %vm567, %v952, -inf
        %956 = vmax.xlane.f32.xlu0 %v955
        %v957 = vpop.xlane.xlu0 %956
        %v958 = vsub.f32 %v952, %v957
        %v959 = vmul.f32 %v958, 1.442695
        %v960 = vpow.pop %v959
        %v962 = vsel %vm567, %v846, 0
        %v965 = vsel %vm567, %v960, 0
        %967 = vmatprep.subr.mxu0 0.0
        %968 = vmatpush1.xpose.msra.mxu0 %v965
        %969 = vmatprep.subr.mxu0 0.0
        %970 = vmatpush1.xpose.msra.mxu0 0.0
        %971 = vmatprep.subr.mxu0 0.0
        %972 = vmatpush1.xpose.msra.mxu0 0.0
        %973 = vmatprep.subr.mxu0 0.0
        %974 = vmatpush1.xpose.msra.mxu0 0.0
        %975 = vmatprep.subr.mxu0 0.0
        %976 = vmatpush1.xpose.msra.mxu0 0.0
        %977 = vmatprep.subr.mxu0 0.0
        %978 = vmatpush1.xpose.msra.mxu0 0.0
        %979 = vmatprep.subr.mxu0 0.0
        %980 = vmatpush1.xpose.msra.mxu0 0.0
        %981 = vmatprep.subr.mxu0 0.0
        %982 = vmatpush1.xpose.msra.mxu0 0.0
        %983 = vmatprep.subr.mxu0 0.0
        %984 = vmatpush1.xpose.msra.mxu0 0.0
        %985 = vmatprep.subr.mxu0 0.0
        %986 = vmatpush1.xpose.msra.mxu0 0.0
        %987 = vmatprep.subr.mxu0 0.0
        %988 = vmatpush1.xpose.msra.mxu0 0.0
        %989 = vmatprep.subr.mxu0 0.0
        %990 = vmatpush1.xpose.msra.mxu0 0.0
        %991 = vmatprep.subr.mxu0 0.0
        %992 = vmatpush1.xpose.msra.mxu0 0.0
        %993 = vmatprep.subr.mxu0 0.0
        %994 = vmatpush1.xpose.msra.mxu0 0.0
        %995 = vmatprep.subr.mxu0 0.0
        %996 = vmatpush1.xpose.msra.mxu0 0.0
        %997 = vmatprep.subr.mxu0 0.0
        %998 = vmatpush1.xpose.msra.mxu0 0.0
        %999 = vmatprep.subr.mxu0 0.0
        %1000 = vmatpush1.xpose.msra.mxu0 0.0
        %1001 = vmatprep.subr.mxu0 0.0
        %1002 = vmatpush1.xpose.msra.mxu0 0.0
        %1003 = vmatprep.subr.mxu0 0.0
        %1004 = vmatpush1.xpose.msra.mxu0 0.0
        %1005 = vmatprep.subr.mxu0 0.0
        %1006 = vmatpush1.xpose.msra.mxu0 0.0
        %1007 = vmatprep.subr.mxu0 0.0
        %1008 = vmatpush1.xpose.msra.mxu0 0.0
        %1009 = vmatprep.subr.mxu0 0.0
        %1010 = vmatpush1.xpose.msra.mxu0 0.0
        %1011 = vmatprep.subr.mxu0 0.0
        %1012 = vmatpush1.xpose.msra.mxu0 0.0
        %1013 = vmatprep.subr.mxu0 0.0
        %1014 = vmatpush1.xpose.msra.mxu0 0.0
        %1015 = vmatprep.subr.mxu0 0.0
        %1016 = vmatpush1.xpose.msra.mxu0 0.0
        %1017 = vmatprep.subr.mxu0 0.0
        %1018 = vmatpush1.xpose.msra.mxu0 0.0
        %1019 = vmatprep.subr.mxu0 0.0
        %1020 = vmatpush1.xpose.msra.mxu0 0.0
        %1021 = vmatprep.subr.mxu0 0.0
        %1022 = vmatpush1.xpose.msra.mxu0 0.0
        %1023 = vmatprep.subr.mxu0 0.0
        %1024 = vmatpush1.xpose.msra.mxu0 0.0
        %1025 = vmatprep.subr.mxu0 0.0
        %1026 = vmatpush1.xpose.msra.mxu0 0.0
        %1027 = vmatprep.subr.mxu0 0.0
        %1028 = vmatpush1.xpose.msra.mxu0 0.0
        %1029 = vmatprep.subr.mxu0 0.0
        %1030 = vmatpush1.xpose.msra.mxu0 0.0
        %1031 = vmatprep.mubr.f32.mxu0 0.0
        %1032 = vmatmul.mubr.f32.gmra.mrb[0].mxu0 %v962
        %v1033 = vpop.f32.mrb[0].mxu0
        %v1034 = vadd.f32 0.0, %v1033
        %v1035 = vpop.f32.mrb[0].mxu0
        %1036 = vdwg.mxu0
        %1037 = vmatprep.subr.mxu0 0.0
        %1038 = vmatpush1.xpose.msra.mxu0 %v965
        %1039 = vmatprep.subr.mxu0 0.0
        %1040 = vmatpush1.xpose.msra.mxu0 0.0
        %1041 = vmatprep.subr.mxu0 0.0
        %1042 = vmatpush1.xpose.msra.mxu0 0.0
        %1043 = vmatprep.subr.mxu0 0.0
        %1044 = vmatpush1.xpose.msra.mxu0 0.0
        %1045 = vmatprep.subr.mxu0 0.0
        %1046 = vmatpush1.xpose.msra.mxu0 0.0
        %1047 = vmatprep.subr.mxu0 0.0
        %1048 = vmatpush1.xpose.msra.mxu0 0.0
        %1049 = vmatprep.subr.mxu0 0.0
        %1050 = vmatpush1.xpose.msra.mxu0 0.0
        %1051 = vmatprep.subr.mxu0 0.0
        %1052 = vmatpush1.xpose.msra.mxu0 0.0
        %1053 = vmatprep.subr.mxu0 0.0
        %1054 = vmatpush1.xpose.msra.mxu0 0.0
        %1055 = vmatprep.subr.mxu0 0.0
        %1056 = vmatpush1.xpose.msra.mxu0 0.0
        %1057 = vmatprep.subr.mxu0 0.0
        %1058 = vmatpush1.xpose.msra.mxu0 0.0
        %1059 = vmatprep.subr.mxu0 0.0
        %1060 = vmatpush1.xpose.msra.mxu0 0.0
        %1061 = vmatprep.subr.mxu0 0.0
        %1062 = vmatpush1.xpose.msra.mxu0 0.0
        %1063 = vmatprep.subr.mxu0 0.0
        %1064 = vmatpush1.xpose.msra.mxu0 0.0
        %1065 = vmatprep.subr.mxu0 0.0
        %1066 = vmatpush1.xpose.msra.mxu0 0.0
        %1067 = vmatprep.subr.mxu0 0.0
        %1068 = vmatpush1.xpose.msra.mxu0 0.0
        %1069 = vmatprep.subr.mxu0 0.0
        %1070 = vmatpush1.xpose.msra.mxu0 0.0
        %1071 = vmatprep.subr.mxu0 0.0
        %1072 = vmatpush1.xpose.msra.mxu0 0.0
        %1073 = vmatprep.subr.mxu0 0.0
        %1074 = vmatpush1.xpose.msra.mxu0 0.0
        %1075 = vmatprep.subr.mxu0 0.0
        %1076 = vmatpush1.xpose.msra.mxu0 0.0
        %1077 = vmatprep.subr.mxu0 0.0
        %1078 = vmatpush1.xpose.msra.mxu0 0.0
        %1079 = vmatprep.subr.mxu0 0.0
        %1080 = vmatpush1.xpose.msra.mxu0 0.0
        %1081 = vmatprep.subr.mxu0 0.0
        %1082 = vmatpush1.xpose.msra.mxu0 0.0
        %1083 = vmatprep.subr.mxu0 0.0
        %1084 = vmatpush1.xpose.msra.mxu0 0.0
        %1085 = vmatprep.subr.mxu0 0.0
        %1086 = vmatpush1.xpose.msra.mxu0 0.0
        %1087 = vmatprep.subr.mxu0 0.0
        %1088 = vmatpush1.xpose.msra.mxu0 0.0
        %1089 = vmatprep.subr.mxu0 0.0
        %1090 = vmatpush1.xpose.msra.mxu0 0.0
        %1091 = vmatprep.subr.mxu0 0.0
        %1092 = vmatpush1.xpose.msra.mxu0 0.0
        %1093 = vmatprep.subr.mxu0 0.0
        %1094 = vmatpush1.xpose.msra.mxu0 0.0
        %1095 = vmatprep.subr.mxu0 0.0
        %1096 = vmatpush1.xpose.msra.mxu0 0.0
        %1097 = vmatprep.subr.mxu0 0.0
        %1098 = vmatpush1.xpose.msra.mxu0 0.0
        %1099 = vmatprep.subr.mxu0 0.0
        %1100 = vmatpush1.xpose.msra.mxu0 0.0
        %1101 = vmatprep.mubr.f32.mxu0 0.0
        %1102 = vmatmul.mubr.f32.gmra.mrb[0].mxu0 %v765
        %v1103 = vpop.f32.mrb[0].mxu0
        %v1104 = vadd.f32 0.0, %v1103
        %v1105 = vpop.f32.mrb[0].mxu0
        %1106 = vdwg.mxu0
        %v1107 = vrcp.pop %v1104
        %v1108 = vlaneseq
        %v1109 = vshrl.u32 %v1108, 7
        %v1110 = vsub.s32 0, %v1109
        %v1111 = vrot.slane %v1107, %v1110
        %v1112 = vmul.f32 %v1034, %v1111
        %1113 = vst.msk [vmem:[#allocation4 + $0x8] sm:$0xff] %vm567, %v1112
        %v1114 = vld [vmem:[#allocation3 + $0x10] sm:$0xff]
        %v1115 = vld [vmem:[#allocation2 + $0x10] sm:$0xff]
        %v1116 = vld [vmem:[#allocation2 + $0x30] sm:$0xff]
        %s1117 = scalar_lea.vmem %s305, 8
        %v1118 = vld [vmem:[%s1117] sm:$0xf]
        %v1119 = vunpack.c.l.bf16 %v1118
        %1120 = vxpose.xlu0.b32.start [1/16] %v1114, 128
        %1121 = vxpose.xlu0.b32.cont [2/16] 0.0, 128
        %1122 = vxpose.xlu0.b32.cont [3/16] 0.0, 128
        %1123 = vxpose.xlu0.b32.cont [4/16] 0.0, 128
        %1124 = vxpose.xlu0.b32.cont [5/16] 0.0, 128
        %1125 = vxpose.xlu0.b32.cont [6/16] 0.0, 128
        %1126 = vxpose.xlu0.b32.cont [7/16] 0.0, 128
        %1127 = vxpose.xlu0.b32.cont [8/16] 0.0, 128
        %1128 = vxpose.xlu0.b32.cont [9/16] 0.0, 128
        %1129 = vxpose.xlu0.b32.cont [10/16] 0.0, 128
        %1130 = vxpose.xlu0.b32.cont [11/16] 0.0, 128
        %1131 = vxpose.xlu0.b32.cont [12/16] 0.0, 128
        %1132 = vxpose.xlu0.b32.cont [13/16] 0.0, 128
        %1133 = vxpose.xlu0.b32.cont [14/16] 0.0, 128
        %1134 = vxpose.xlu0.b32.cont [15/16] 0.0, 128
        %1135 = vxpose.xlu0.b32.end [16/16] 0.0, 128
        %v1136 = vpop.trf.xlu0
        %v1137 = vpop.trf.xlu0
        %v1138 = vpop.trf.xlu0
        %v1139 = vpop.trf.xlu0
        %v1140 = vpop.trf.xlu0
        %v1141 = vpop.trf.xlu0
        %v1142 = vpop.trf.xlu0
        %v1143 = vpop.trf.xlu0
        %v1144 = vpop.trf.xlu0
        %v1145 = vpop.trf.xlu0
        %v1146 = vpop.trf.xlu0
        %v1147 = vpop.trf.xlu0
        %v1148 = vpop.trf.xlu0
        %v1149 = vpop.trf.xlu0
        %v1150 = vpop.trf.xlu0
        %v1151 = vpop.trf.xlu0
        %v1153 = vsel %vm567, %v1136, 0
        %1155 = vmatprep.subr.mxu0 0.0
        %1156 = vmatpush1.msra.mxu0 %v1115
        %1157 = vmatprep.subr.mxu0 0.0
        %1158 = vmatpush1.msra.mxu0 0.0
        %1159 = vmatprep.subr.mxu0 0.0
        %1160 = vmatpush1.msra.mxu0 0.0
        %1161 = vmatprep.subr.mxu0 0.0
        %1162 = vmatpush1.msra.mxu0 0.0
        %1163 = vmatprep.subr.mxu0 0.0
        %1164 = vmatpush1.msra.mxu0 0.0
        %1165 = vmatprep.subr.mxu0 0.0
        %1166 = vmatpush1.msra.mxu0 0.0
        %1167 = vmatprep.subr.mxu0 0.0
        %1168 = vmatpush1.msra.mxu0 0.0
        %1169 = vmatprep.subr.mxu0 0.0
        %1170 = vmatpush1.msra.mxu0 0.0
        %1171 = vmatprep.subr.mxu0 0.0
        %1172 = vmatpush1.msra.mxu0 0.0
        %1173 = vmatprep.subr.mxu0 0.0
        %1174 = vmatpush1.msra.mxu0 0.0
        %1175 = vmatprep.subr.mxu0 0.0
        %1176 = vmatpush1.msra.mxu0 0.0
        %1177 = vmatprep.subr.mxu0 0.0
        %1178 = vmatpush1.msra.mxu0 0.0
        %1179 = vmatprep.subr.mxu0 0.0
        %1180 = vmatpush1.msra.mxu0 0.0
        %1181 = vmatprep.subr.mxu0 0.0
        %1182 = vmatpush1.msra.mxu0 0.0
        %1183 = vmatprep.subr.mxu0 0.0
        %1184 = vmatpush1.msra.mxu0 0.0
        %1185 = vmatprep.subr.mxu0 0.0
        %1186 = vmatpush1.msra.mxu0 0.0
        %1187 = vmatprep.subr.mxu0 0.0
        %1188 = vmatpush1.msra.mxu0 0.0
        %1189 = vmatprep.subr.mxu0 0.0
        %1190 = vmatpush1.msra.mxu0 0.0
        %1191 = vmatprep.subr.mxu0 0.0
        %1192 = vmatpush1.msra.mxu0 0.0
        %1193 = vmatprep.subr.mxu0 0.0
        %1194 = vmatpush1.msra.mxu0 0.0
        %1195 = vmatprep.subr.mxu0 0.0
        %1196 = vmatpush1.msra.mxu0 0.0
        %1197 = vmatprep.subr.mxu0 0.0
        %1198 = vmatpush1.msra.mxu0 0.0
        %1199 = vmatprep.subr.mxu0 0.0
        %1200 = vmatpush1.msra.mxu0 0.0
        %1201 = vmatprep.subr.mxu0 0.0
        %1202 = vmatpush1.msra.mxu0 0.0
        %1203 = vmatprep.subr.mxu0 0.0
        %1204 = vmatpush1.msra.mxu0 0.0
        %1205 = vmatprep.subr.mxu0 0.0
        %1206 = vmatpush1.msra.mxu0 0.0
        %1207 = vmatprep.subr.mxu0 0.0
        %1208 = vmatpush1.msra.mxu0 0.0
        %1209 = vmatprep.subr.mxu0 0.0
        %1210 = vmatpush1.msra.mxu0 0.0
        %1211 = vmatprep.subr.mxu0 0.0
        %1212 = vmatpush1.msra.mxu0 0.0
        %1213 = vmatprep.subr.mxu0 0.0
        %1214 = vmatpush1.msra.mxu0 0.0
        %1215 = vmatprep.subr.mxu0 0.0
        %1216 = vmatpush1.msra.mxu0 0.0
        %1217 = vmatprep.subr.mxu0 0.0
        %1218 = vmatpush1.msra.mxu0 0.0
        %1219 = vmatprep.mubr.f32.mxu0 0.0
        %1220 = vmatmul.mubr.f32.gmra.mrb[0].mxu0 %v1153
        %v1221 = vpop.f32.mrb[0].mxu0
        %v1222 = vadd.f32 %v1119, %v1221
        %v1223 = vpop.f32.mrb[0].mxu0
        %1224 = vdwg.mxu0
        %v1225 = vsel %vm567, %v1222, -inf
        %1226 = vmax.xlane.f32.xlu0 %v1225
        %v1227 = vpop.xlane.xlu0 %1226
        %v1228 = vsub.f32 %v1222, %v1227
        %v1229 = vmul.f32 %v1228, 1.442695
        %v1230 = vpow.pop %v1229
        %v1232 = vsel %vm567, %v1116, 0
        %v1235 = vsel %vm567, %v1230, 0
        %1237 = vmatprep.subr.mxu0 0.0
        %1238 = vmatpush1.xpose.msra.mxu0 %v1235
        %1239 = vmatprep.subr.mxu0 0.0
        %1240 = vmatpush1.xpose.msra.mxu0 0.0
        %1241 = vmatprep.subr.mxu0 0.0
        %1242 = vmatpush1.xpose.msra.mxu0 0.0
        %1243 = vmatprep.subr.mxu0 0.0
        %1244 = vmatpush1.xpose.msra.mxu0 0.0
        %1245 = vmatprep.subr.mxu0 0.0
        %1246 = vmatpush1.xpose.msra.mxu0 0.0
        %1247 = vmatprep.subr.mxu0 0.0
        %1248 = vmatpush1.xpose.msra.mxu0 0.0
        %1249 = vmatprep.subr.mxu0 0.0
        %1250 = vmatpush1.xpose.msra.mxu0 0.0
        %1251 = vmatprep.subr.mxu0 0.0
        %1252 = vmatpush1.xpose.msra.mxu0 0.0
        %1253 = vmatprep.subr.mxu0 0.0
        %1254 = vmatpush1.xpose.msra.mxu0 0.0
        %1255 = vmatprep.subr.mxu0 0.0
        %1256 = vmatpush1.xpose.msra.mxu0 0.0
        %1257 = vmatprep.subr.mxu0 0.0
        %1258 = vmatpush1.xpose.msra.mxu0 0.0
        %1259 = vmatprep.subr.mxu0 0.0
        %1260 = vmatpush1.xpose.msra.mxu0 0.0
        %1261 = vmatprep.subr.mxu0 0.0
        %1262 = vmatpush1.xpose.msra.mxu0 0.0
        %1263 = vmatprep.subr.mxu0 0.0
        %1264 = vmatpush1.xpose.msra.mxu0 0.0
        %1265 = vmatprep.subr.mxu0 0.0
        %1266 = vmatpush1.xpose.msra.mxu0 0.0
        %1267 = vmatprep.subr.mxu0 0.0
        %1268 = vmatpush1.xpose.msra.mxu0 0.0
        %1269 = vmatprep.subr.mxu0 0.0
        %1270 = vmatpush1.xpose.msra.mxu0 0.0
        %1271 = vmatprep.subr.mxu0 0.0
        %1272 = vmatpush1.xpose.msra.mxu0 0.0
        %1273 = vmatprep.subr.mxu0 0.0
        %1274 = vmatpush1.xpose.msra.mxu0 0.0
        %1275 = vmatprep.subr.mxu0 0.0
        %1276 = vmatpush1.xpose.msra.mxu0 0.0
        %1277 = vmatprep.subr.mxu0 0.0
        %1278 = vmatpush1.xpose.msra.mxu0 0.0
        %1279 = vmatprep.subr.mxu0 0.0
        %1280 = vmatpush1.xpose.msra.mxu0 0.0
        %1281 = vmatprep.subr.mxu0 0.0
        %1282 = vmatpush1.xpose.msra.mxu0 0.0
        %1283 = vmatprep.subr.mxu0 0.0
        %1284 = vmatpush1.xpose.msra.mxu0 0.0
        %1285 = vmatprep.subr.mxu0 0.0
        %1286 = vmatpush1.xpose.msra.mxu0 0.0
        %1287 = vmatprep.subr.mxu0 0.0
        %1288 = vmatpush1.xpose.msra.mxu0 0.0
        %1289 = vmatprep.subr.mxu0 0.0
        %1290 = vmatpush1.xpose.msra.mxu0 0.0
        %1291 = vmatprep.subr.mxu0 0.0
        %1292 = vmatpush1.xpose.msra.mxu0 0.0
        %1293 = vmatprep.subr.mxu0 0.0
        %1294 = vmatpush1.xpose.msra.mxu0 0.0
        %1295 = vmatprep.subr.mxu0 0.0
        %1296 = vmatpush1.xpose.msra.mxu0 0.0
        %1297 = vmatprep.subr.mxu0 0.0
        %1298 = vmatpush1.xpose.msra.mxu0 0.0
        %1299 = vmatprep.subr.mxu0 0.0
        %1300 = vmatpush1.xpose.msra.mxu0 0.0
        %1301 = vmatprep.mubr.f32.mxu0 0.0
        %1302 = vmatmul.mubr.f32.gmra.mrb[0].mxu0 %v1232
        %v1303 = vpop.f32.mrb[0].mxu0
        %v1304 = vadd.f32 0.0, %v1303
        %v1305 = vpop.f32.mrb[0].mxu0
        %1306 = vdwg.mxu0
        %1307 = vmatprep.subr.mxu0 0.0
        %1308 = vmatpush1.xpose.msra.mxu0 %v1235
        %1309 = vmatprep.subr.mxu0 0.0
        %1310 = vmatpush1.xpose.msra.mxu0 0.0
        %1311 = vmatprep.subr.mxu0 0.0
        %1312 = vmatpush1.xpose.msra.mxu0 0.0
        %1313 = vmatprep.subr.mxu0 0.0
        %1314 = vmatpush1.xpose.msra.mxu0 0.0
        %1315 = vmatprep.subr.mxu0 0.0
        %1316 = vmatpush1.xpose.msra.mxu0 0.0
        %1317 = vmatprep.subr.mxu0 0.0
        %1318 = vmatpush1.xpose.msra.mxu0 0.0
        %1319 = vmatprep.subr.mxu0 0.0
        %1320 = vmatpush1.xpose.msra.mxu0 0.0
        %1321 = vmatprep.subr.mxu0 0.0
        %1322 = vmatpush1.xpose.msra.mxu0 0.0
        %1323 = vmatprep.subr.mxu0 0.0
        %1324 = vmatpush1.xpose.msra.mxu0 0.0
        %1325 = vmatprep.subr.mxu0 0.0
        %1326 = vmatpush1.xpose.msra.mxu0 0.0
        %1327 = vmatprep.subr.mxu0 0.0
        %1328 = vmatpush1.xpose.msra.mxu0 0.0
        %1329 = vmatprep.subr.mxu0 0.0
        %1330 = vmatpush1.xpose.msra.mxu0 0.0
        %1331 = vmatprep.subr.mxu0 0.0
        %1332 = vmatpush1.xpose.msra.mxu0 0.0
        %1333 = vmatprep.subr.mxu0 0.0
        %1334 = vmatpush1.xpose.msra.mxu0 0.0
        %1335 = vmatprep.subr.mxu0 0.0
        %1336 = vmatpush1.xpose.msra.mxu0 0.0
        %1337 = vmatprep.subr.mxu0 0.0
        %1338 = vmatpush1.xpose.msra.mxu0 0.0
        %1339 = vmatprep.subr.mxu0 0.0
        %1340 = vmatpush1.xpose.msra.mxu0 0.0
        %1341 = vmatprep.subr.mxu0 0.0
        %1342 = vmatpush1.xpose.msra.mxu0 0.0
        %1343 = vmatprep.subr.mxu0 0.0
        %1344 = vmatpush1.xpose.msra.mxu0 0.0
        %1345 = vmatprep.subr.mxu0 0.0
        %1346 = vmatpush1.xpose.msra.mxu0 0.0
        %1347 = vmatprep.subr.mxu0 0.0
        %1348 = vmatpush1.xpose.msra.mxu0 0.0
        %1349 = vmatprep.subr.mxu0 0.0
        %1350 = vmatpush1.xpose.msra.mxu0 0.0
        %1351 = vmatprep.subr.mxu0 0.0
        %1352 = vmatpush1.xpose.msra.mxu0 0.0
        %1353 = vmatprep.subr.mxu0 0.0
        %1354 = vmatpush1.xpose.msra.mxu0 0.0
        %1355 = vmatprep.subr.mxu0 0.0
        %1356 = vmatpush1.xpose.msra.mxu0 0.0
        %1357 = vmatprep.subr.mxu0 0.0
        %1358 = vmatpush1.xpose.msra.mxu0 0.0
        %1359 = vmatprep.subr.mxu0 0.0
        %1360 = vmatpush1.xpose.msra.mxu0 0.0
        %1361 = vmatprep.subr.mxu0 0.0
        %1362 = vmatpush1.xpose.msra.mxu0 0.0
        %1363 = vmatprep.subr.mxu0 0.0
        %1364 = vmatpush1.xpose.msra.mxu0 0.0
        %1365 = vmatprep.subr.mxu0 0.0
        %1366 = vmatpush1.xpose.msra.mxu0 0.0
        %1367 = vmatprep.subr.mxu0 0.0
        %1368 = vmatpush1.xpose.msra.mxu0 0.0
        %1369 = vmatprep.subr.mxu0 0.0
        %1370 = vmatpush1.xpose.msra.mxu0 0.0
        %1371 = vmatprep.mubr.f32.mxu0 0.0
        %1372 = vmatmul.mubr.f32.gmra.mrb[0].mxu0 %v765
        %v1373 = vpop.f32.mrb[0].mxu0
        %v1374 = vadd.f32 0.0, %v1373
        %v1375 = vpop.f32.mrb[0].mxu0
        %1376 = vdwg.mxu0
        %v1377 = vrcp.pop %v1374
        %v1378 = vlaneseq
        %v1379 = vshrl.u32 %v1378, 7
        %v1380 = vsub.s32 0, %v1379
        %v1381 = vrot.slane %v1377, %v1380
        %v1382 = vmul.f32 %v1304, %v1381
        %1383 = vst.msk [vmem:[#allocation4 + $0x10] sm:$0xff] %vm567, %v1382
        %v1384 = vld [vmem:[#allocation3 + $0x18] sm:$0xff]
        %v1385 = vld [vmem:[#allocation2 + $0x18] sm:$0xff]
        %v1386 = vld [vmem:[#allocation2 + $0x38] sm:$0xff]
        %s1387 = scalar_lea.vmem %s305, 12
        %v1388 = vld [vmem:[%s1387] sm:$0xf]
        %v1389 = vunpack.c.l.bf16 %v1388
        %1390 = vxpose.xlu0.b32.start [1/16] %v1384, 128
        %1391 = vxpose.xlu0.b32.cont [2/16] 0.0, 128
        %1392 = vxpose.xlu0.b32.cont [3/16] 0.0, 128
        %1393 = vxpose.xlu0.b32.cont [4/16] 0.0, 128
        %1394 = vxpose.xlu0.b32.cont [5/16] 0.0, 128
        %1395 = vxpose.xlu0.b32.cont [6/16] 0.0, 128
        %1396 = vxpose.xlu0.b32.cont [7/16] 0.0, 128
        %1397 = vxpose.xlu0.b32.cont [8/16] 0.0, 128
        %1398 = vxpose.xlu0.b32.cont [9/16] 0.0, 128
        %1399 = vxpose.xlu0.b32.cont [10/16] 0.0, 128
        %1400 = vxpose.xlu0.b32.cont [11/16] 0.0, 128
        %1401 = vxpose.xlu0.b32.cont [12/16] 0.0, 128
        %1402 = vxpose.xlu0.b32.cont [13/16] 0.0, 128
        %1403 = vxpose.xlu0.b32.cont [14/16] 0.0, 128
        %1404 = vxpose.xlu0.b32.cont [15/16] 0.0, 128
        %1405 = vxpose.xlu0.b32.end [16/16] 0.0, 128
        %v1406 = vpop.trf.xlu0
        %v1407 = vpop.trf.xlu0
        %v1408 = vpop.trf.xlu0
        %v1409 = vpop.trf.xlu0
        %v1410 = vpop.trf.xlu0
        %v1411 = vpop.trf.xlu0
        %v1412 = vpop.trf.xlu0
        %v1413 = vpop.trf.xlu0
        %v1414 = vpop.trf.xlu0
        %v1415 = vpop.trf.xlu0
        %v1416 = vpop.trf.xlu0
        %v1417 = vpop.trf.xlu0
        %v1418 = vpop.trf.xlu0
        %v1419 = vpop.trf.xlu0
        %v1420 = vpop.trf.xlu0
        %v1421 = vpop.trf.xlu0
        %v1423 = vsel %vm567, %v1406, 0
        %1425 = vmatprep.subr.mxu0 0.0
        %1426 = vmatpush1.msra.mxu0 %v1385
        %1427 = vmatprep.subr.mxu0 0.0
        %1428 = vmatpush1.msra.mxu0 0.0
        %1429 = vmatprep.subr.mxu0 0.0
        %1430 = vmatpush1.msra.mxu0 0.0
        %1431 = vmatprep.subr.mxu0 0.0
        %1432 = vmatpush1.msra.mxu0 0.0
        %1433 = vmatprep.subr.mxu0 0.0
        %1434 = vmatpush1.msra.mxu0 0.0
        %1435 = vmatprep.subr.mxu0 0.0
        %1436 = vmatpush1.msra.mxu0 0.0
        %1437 = vmatprep.subr.mxu0 0.0
        %1438 = vmatpush1.msra.mxu0 0.0
        %1439 = vmatprep.subr.mxu0 0.0
        %1440 = vmatpush1.msra.mxu0 0.0
        %1441 = vmatprep.subr.mxu0 0.0
        %1442 = vmatpush1.msra.mxu0 0.0
        %1443 = vmatprep.subr.mxu0 0.0
        %1444 = vmatpush1.msra.mxu0 0.0
        %1445 = vmatprep.subr.mxu0 0.0
        %1446 = vmatpush1.msra.mxu0 0.0
        %1447 = vmatprep.subr.mxu0 0.0
        %1448 = vmatpush1.msra.mxu0 0.0
        %1449 = vmatprep.subr.mxu0 0.0
        %1450 = vmatpush1.msra.mxu0 0.0
        %1451 = vmatprep.subr.mxu0 0.0
        %1452 = vmatpush1.msra.mxu0 0.0
        %1453 = vmatprep.subr.mxu0 0.0
        %1454 = vmatpush1.msra.mxu0 0.0
        %1455 = vmatprep.subr.mxu0 0.0
        %1456 = vmatpush1.msra.mxu0 0.0
        %1457 = vmatprep.subr.mxu0 0.0
        %1458 = vmatpush1.msra.mxu0 0.0
        %1459 = vmatprep.subr.mxu0 0.0
        %1460 = vmatpush1.msra.mxu0 0.0
        %1461 = vmatprep.subr.mxu0 0.0
        %1462 = vmatpush1.msra.mxu0 0.0
        %1463 = vmatprep.subr.mxu0 0.0
        %1464 = vmatpush1.msra.mxu0 0.0
        %1465 = vmatprep.subr.mxu0 0.0
        %1466 = vmatpush1.msra.mxu0 0.0
        %1467 = vmatprep.subr.mxu0 0.0
        %1468 = vmatpush1.msra.mxu0 0.0
        %1469 = vmatprep.subr.mxu0 0.0
        %1470 = vmatpush1.msra.mxu0 0.0
        %1471 = vmatprep.subr.mxu0 0.0
        %1472 = vmatpush1.msra.mxu0 0.0
        %1473 = vmatprep.subr.mxu0 0.0
        %1474 = vmatpush1.msra.mxu0 0.0
        %1475 = vmatprep.subr.mxu0 0.0
        %1476 = vmatpush1.msra.mxu0 0.0
        %1477 = vmatprep.subr.mxu0 0.0
        %1478 = vmatpush1.msra.mxu0 0.0
        %1479 = vmatprep.subr.mxu0 0.0
        %1480 = vmatpush1.msra.mxu0 0.0
        %1481 = vmatprep.subr.mxu0 0.0
        %1482 = vmatpush1.msra.mxu0 0.0
        %1483 = vmatprep.subr.mxu0 0.0
        %1484 = vmatpush1.msra.mxu0 0.0
        %1485 = vmatprep.subr.mxu0 0.0
        %1486 = vmatpush1.msra.mxu0 0.0
        %1487 = vmatprep.subr.mxu0 0.0
        %1488 = vmatpush1.msra.mxu0 0.0
        %1489 = vmatprep.mubr.f32.mxu0 0.0
        %1490 = vmatmul.mubr.f32.gmra.mrb[0].mxu0 %v1423
        %v1491 = vpop.f32.mrb[0].mxu0
        %v1492 = vadd.f32 %v1389, %v1491
        %v1493 = vpop.f32.mrb[0].mxu0
        %1494 = vdwg.mxu0
        %v1495 = vsel %vm567, %v1492, -inf
        %1496 = vmax.xlane.f32.xlu0 %v1495
        %v1497 = vpop.xlane.xlu0 %1496
        %v1498 = vsub.f32 %v1492, %v1497
        %v1499 = vmul.f32 %v1498, 1.442695
        %v1500 = vpow.pop %v1499
        %v1502 = vsel %vm567, %v1386, 0
        %v1505 = vsel %vm567, %v1500, 0
        %1507 = vmatprep.subr.mxu0 0.0
        %1508 = vmatpush1.xpose.msra.mxu0 %v1505
        %1509 = vmatprep.subr.mxu0 0.0
        %1510 = vmatpush1.xpose.msra.mxu0 0.0
        %1511 = vmatprep.subr.mxu0 0.0
        %1512 = vmatpush1.xpose.msra.mxu0 0.0
        %1513 = vmatprep.subr.mxu0 0.0
        %1514 = vmatpush1.xpose.msra.mxu0 0.0
        %1515 = vmatprep.subr.mxu0 0.0
        %1516 = vmatpush1.xpose.msra.mxu0 0.0
        %1517 = vmatprep.subr.mxu0 0.0
        %1518 = vmatpush1.xpose.msra.mxu0 0.0
        %1519 = vmatprep.subr.mxu0 0.0
        %1520 = vmatpush1.xpose.msra.mxu0 0.0
        %1521 = vmatprep.subr.mxu0 0.0
        %1522 = vmatpush1.xpose.msra.mxu0 0.0
        %1523 = vmatprep.subr.mxu0 0.0
        %1524 = vmatpush1.xpose.msra.mxu0 0.0
        %1525 = vmatprep.subr.mxu0 0.0
        %1526 = vmatpush1.xpose.msra.mxu0 0.0
        %1527 = vmatprep.subr.mxu0 0.0
        %1528 = vmatpush1.xpose.msra.mxu0 0.0
        %1529 = vmatprep.subr.mxu0 0.0
        %1530 = vmatpush1.xpose.msra.mxu0 0.0
        %1531 = vmatprep.subr.mxu0 0.0
        %1532 = vmatpush1.xpose.msra.mxu0 0.0
        %1533 = vmatprep.subr.mxu0 0.0
        %1534 = vmatpush1.xpose.msra.mxu0 0.0
        %1535 = vmatprep.subr.mxu0 0.0
        %1536 = vmatpush1.xpose.msra.mxu0 0.0
        %1537 = vmatprep.subr.mxu0 0.0
        %1538 = vmatpush1.xpose.msra.mxu0 0.0
        %1539 = vmatprep.subr.mxu0 0.0
        %1540 = vmatpush1.xpose.msra.mxu0 0.0
        %1541 = vmatprep.subr.mxu0 0.0
        %1542 = vmatpush1.xpose.msra.mxu0 0.0
        %1543 = vmatprep.subr.mxu0 0.0
        %1544 = vmatpush1.xpose.msra.mxu0 0.0
        %1545 = vmatprep.subr.mxu0 0.0
        %1546 = vmatpush1.xpose.msra.mxu0 0.0
        %1547 = vmatprep.subr.mxu0 0.0
        %1548 = vmatpush1.xpose.msra.mxu0 0.0
        %1549 = vmatprep.subr.mxu0 0.0
        %1550 = vmatpush1.xpose.msra.mxu0 0.0
        %1551 = vmatprep.subr.mxu0 0.0
        %1552 = vmatpush1.xpose.msra.mxu0 0.0
        %1553 = vmatprep.subr.mxu0 0.0
        %1554 = vmatpush1.xpose.msra.mxu0 0.0
        %1555 = vmatprep.subr.mxu0 0.0
        %1556 = vmatpush1.xpose.msra.mxu0 0.0
        %1557 = vmatprep.subr.mxu0 0.0
        %1558 = vmatpush1.xpose.msra.mxu0 0.0
        %1559 = vmatprep.subr.mxu0 0.0
        %1560 = vmatpush1.xpose.msra.mxu0 0.0
        %1561 = vmatprep.subr.mxu0 0.0
        %1562 = vmatpush1.xpose.msra.mxu0 0.0
        %1563 = vmatprep.subr.mxu0 0.0
        %1564 = vmatpush1.xpose.msra.mxu0 0.0
        %1565 = vmatprep.subr.mxu0 0.0
        %1566 = vmatpush1.xpose.msra.mxu0 0.0
        %1567 = vmatprep.subr.mxu0 0.0
        %1568 = vmatpush1.xpose.msra.mxu0 0.0
        %1569 = vmatprep.subr.mxu0 0.0
        %1570 = vmatpush1.xpose.msra.mxu0 0.0
        %1571 = vmatprep.mubr.f32.mxu0 0.0
        %1572 = vmatmul.mubr.f32.gmra.mrb[0].mxu0 %v1502
        %v1573 = vpop.f32.mrb[0].mxu0
        %v1574 = vadd.f32 0.0, %v1573
        %v1575 = vpop.f32.mrb[0].mxu0
        %1576 = vdwg.mxu0
        %1577 = vmatprep.subr.mxu0 0.0
        %1578 = vmatpush1.xpose.msra.mxu0 %v1505
        %1579 = vmatprep.subr.mxu0 0.0
        %1580 = vmatpush1.xpose.msra.mxu0 0.0
        %1581 = vmatprep.subr.mxu0 0.0
        %1582 = vmatpush1.xpose.msra.mxu0 0.0
        %1583 = vmatprep.subr.mxu0 0.0
        %1584 = vmatpush1.xpose.msra.mxu0 0.0
        %1585 = vmatprep.subr.mxu0 0.0
        %1586 = vmatpush1.xpose.msra.mxu0 0.0
        %1587 = vmatprep.subr.mxu0 0.0
        %1588 = vmatpush1.xpose.msra.mxu0 0.0
        %1589 = vmatprep.subr.mxu0 0.0
        %1590 = vmatpush1.xpose.msra.mxu0 0.0
        %1591 = vmatprep.subr.mxu0 0.0
        %1592 = vmatpush1.xpose.msra.mxu0 0.0
        %1593 = vmatprep.subr.mxu0 0.0
        %1594 = vmatpush1.xpose.msra.mxu0 0.0
        %1595 = vmatprep.subr.mxu0 0.0
        %1596 = vmatpush1.xpose.msra.mxu0 0.0
        %1597 = vmatprep.subr.mxu0 0.0
        %1598 = vmatpush1.xpose.msra.mxu0 0.0
        %1599 = vmatprep.subr.mxu0 0.0
        %1600 = vmatpush1.xpose.msra.mxu0 0.0
        %1601 = vmatprep.subr.mxu0 0.0
        %1602 = vmatpush1.xpose.msra.mxu0 0.0
        %1603 = vmatprep.subr.mxu0 0.0
        %1604 = vmatpush1.xpose.msra.mxu0 0.0
        %1605 = vmatprep.subr.mxu0 0.0
        %1606 = vmatpush1.xpose.msra.mxu0 0.0
        %1607 = vmatprep.subr.mxu0 0.0
        %1608 = vmatpush1.xpose.msra.mxu0 0.0
        %1609 = vmatprep.subr.mxu0 0.0
        %1610 = vmatpush1.xpose.msra.mxu0 0.0
        %1611 = vmatprep.subr.mxu0 0.0
        %1612 = vmatpush1.xpose.msra.mxu0 0.0
        %1613 = vmatprep.subr.mxu0 0.0
        %1614 = vmatpush1.xpose.msra.mxu0 0.0
        %1615 = vmatprep.subr.mxu0 0.0
        %1616 = vmatpush1.xpose.msra.mxu0 0.0
        %1617 = vmatprep.subr.mxu0 0.0
        %1618 = vmatpush1.xpose.msra.mxu0 0.0
        %1619 = vmatprep.subr.mxu0 0.0
        %1620 = vmatpush1.xpose.msra.mxu0 0.0
        %1621 = vmatprep.subr.mxu0 0.0
        %1622 = vmatpush1.xpose.msra.mxu0 0.0
        %1623 = vmatprep.subr.mxu0 0.0
        %1624 = vmatpush1.xpose.msra.mxu0 0.0
        %1625 = vmatprep.subr.mxu0 0.0
        %1626 = vmatpush1.xpose.msra.mxu0 0.0
        %1627 = vmatprep.subr.mxu0 0.0
        %1628 = vmatpush1.xpose.msra.mxu0 0.0
        %1629 = vmatprep.subr.mxu0 0.0
        %1630 = vmatpush1.xpose.msra.mxu0 0.0
        %1631 = vmatprep.subr.mxu0 0.0
        %1632 = vmatpush1.xpose.msra.mxu0 0.0
        %1633 = vmatprep.subr.mxu0 0.0
        %1634 = vmatpush1.xpose.msra.mxu0 0.0
        %1635 = vmatprep.subr.mxu0 0.0
        %1636 = vmatpush1.xpose.msra.mxu0 0.0
        %1637 = vmatprep.subr.mxu0 0.0
        %1638 = vmatpush1.xpose.msra.mxu0 0.0
        %1639 = vmatprep.subr.mxu0 0.0
        %1640 = vmatpush1.xpose.msra.mxu0 0.0
        %1641 = vmatprep.mubr.f32.mxu0 0.0
        %1642 = vmatmul.mubr.f32.gmra.mrb[0].mxu0 %v765
        %v1643 = vpop.f32.mrb[0].mxu0
        %v1644 = vadd.f32 0.0, %v1643
        %v1645 = vpop.f32.mrb[0].mxu0
        %1646 = vdwg.mxu0
        %v1647 = vrcp.pop %v1644
        %v1648 = vlaneseq
        %v1649 = vshrl.u32 %v1648, 7
        %v1650 = vsub.s32 0, %v1649
        %v1651 = vrot.slane %v1647, %v1650
        %v1652 = vmul.f32 %v1574, %v1651
        %1653 = vst.msk [vmem:[#allocation4 + $0x18] sm:$0xff] %vm567, %v1652
        %v1654 = vld [vmem:[#allocation4] sm:$0xff]
        %v1655 = vld [vmem:[#allocation4 + $0x8] sm:$0xff]
        %v1656 = vld [vmem:[#allocation4 + $0x10] sm:$0xff]
        %v1657 = vld [vmem:[#allocation4 + $0x18] sm:$0xff]
        %v1658 = vld [vmem:[%s3] sm:$0xff]
        %v1659 = vld [vmem:[%s3 + $0x8] sm:$0xff]
        %v1660 = vld [vmem:[%s3 + $0x10] sm:$0xff]
        %v1661 = vld [vmem:[%s3 + $0x18] sm:$0xff]
        %v1662 = vld [vmem:[%s4] sm:$0x1]
        %v1664 = vlaneseq
        %v1665 = vshrl.u32 %v1664, 7
        %v1666 = vsub.s32 0, %v1665
        %v1667 = vrot.slane %v1662, %v1666
        %1669 = vxpose.xlu0.b32.start [1/16] %v1654, 128
        %1670 = vxpose.xlu0.b32.cont [2/16] %v1655, 128
        %1671 = vxpose.xlu0.b32.cont [3/16] %v1656, 128
        %1672 = vxpose.xlu0.b32.cont [4/16] %v1657, 128
        %1673 = vxpose.xlu0.b32.cont [5/16] 0.0, 128
        %1674 = vxpose.xlu0.b32.cont [6/16] 0.0, 128
        %1675 = vxpose.xlu0.b32.cont [7/16] 0.0, 128
        %1676 = vxpose.xlu0.b32.cont [8/16] 0.0, 128
        %1677 = vxpose.xlu0.b32.cont [9/16] 0.0, 128
        %1678 = vxpose.xlu0.b32.cont [10/16] 0.0, 128
        %1679 = vxpose.xlu0.b32.cont [11/16] 0.0, 128
        %1680 = vxpose.xlu0.b32.cont [12/16] 0.0, 128
        %1681 = vxpose.xlu0.b32.cont [13/16] 0.0, 128
        %1682 = vxpose.xlu0.b32.cont [14/16] 0.0, 128
        %1683 = vxpose.xlu0.b32.cont [15/16] 0.0, 128
        %1684 = vxpose.xlu0.b32.end [16/16] 0.0, 128
        %v1685 = vpop.trf.xlu0
        %v1686 = vpop.trf.xlu0
        %v1687 = vpop.trf.xlu0
        %v1688 = vpop.trf.xlu0
        %v1689 = vpop.trf.xlu0
        %v1690 = vpop.trf.xlu0
        %v1691 = vpop.trf.xlu0
        %v1692 = vpop.trf.xlu0
        %v1693 = vpop.trf.xlu0
        %v1694 = vpop.trf.xlu0
        %v1695 = vpop.trf.xlu0
        %v1696 = vpop.trf.xlu0
        %v1697 = vpop.trf.xlu0
        %v1698 = vpop.trf.xlu0
        %v1699 = vpop.trf.xlu0
        %v1700 = vpop.trf.xlu0
        %v1702 = vsel %vm466, %v1685, 0
        %1704 = vmatprep.subr.mxu0 0.0
        %1705 = vmatpush1.msra.mxu0 %v1658
        %1706 = vmatprep.subr.mxu0 0.0
        %1707 = vmatpush1.msra.mxu0 %v1659
        %1708 = vmatprep.subr.mxu0 0.0
        %1709 = vmatpush1.msra.mxu0 %v1660
        %1710 = vmatprep.subr.mxu0 0.0
        %1711 = vmatpush1.msra.mxu0 %v1661
        %1712 = vmatprep.subr.mxu0 0.0
        %1713 = vmatpush1.msra.mxu0 0.0
        %1714 = vmatprep.subr.mxu0 0.0
        %1715 = vmatpush1.msra.mxu0 0.0
        %1716 = vmatprep.subr.mxu0 0.0
        %1717 = vmatpush1.msra.mxu0 0.0
        %1718 = vmatprep.subr.mxu0 0.0
        %1719 = vmatpush1.msra.mxu0 0.0
        %1720 = vmatprep.subr.mxu0 0.0
        %1721 = vmatpush1.msra.mxu0 0.0
        %1722 = vmatprep.subr.mxu0 0.0
        %1723 = vmatpush1.msra.mxu0 0.0
        %1724 = vmatprep.subr.mxu0 0.0
        %1725 = vmatpush1.msra.mxu0 0.0
        %1726 = vmatprep.subr.mxu0 0.0
        %1727 = vmatpush1.msra.mxu0 0.0
        %1728 = vmatprep.subr.mxu0 0.0
        %1729 = vmatpush1.msra.mxu0 0.0
        %1730 = vmatprep.subr.mxu0 0.0
        %1731 = vmatpush1.msra.mxu0 0.0
        %1732 = vmatprep.subr.mxu0 0.0
        %1733 = vmatpush1.msra.mxu0 0.0
        %1734 = vmatprep.subr.mxu0 0.0
        %1735 = vmatpush1.msra.mxu0 0.0
        %1736 = vmatprep.subr.mxu0 0.0
        %1737 = vmatpush1.msra.mxu0 0.0
        %1738 = vmatprep.subr.mxu0 0.0
        %1739 = vmatpush1.msra.mxu0 0.0
        %1740 = vmatprep.subr.mxu0 0.0
        %1741 = vmatpush1.msra.mxu0 0.0
        %1742 = vmatprep.subr.mxu0 0.0
        %1743 = vmatpush1.msra.mxu0 0.0
        %1744 = vmatprep.subr.mxu0 0.0
        %1745 = vmatpush1.msra.mxu0 0.0
        %1746 = vmatprep.subr.mxu0 0.0
        %1747 = vmatpush1.msra.mxu0 0.0
        %1748 = vmatprep.subr.mxu0 0.0
        %1749 = vmatpush1.msra.mxu0 0.0
        %1750 = vmatprep.subr.mxu0 0.0
        %1751 = vmatpush1.msra.mxu0 0.0
        %1752 = vmatprep.subr.mxu0 0.0
        %1753 = vmatpush1.msra.mxu0 0.0
        %1754 = vmatprep.subr.mxu0 0.0
        %1755 = vmatpush1.msra.mxu0 0.0
        %1756 = vmatprep.subr.mxu0 0.0
        %1757 = vmatpush1.msra.mxu0 0.0
        %1758 = vmatprep.subr.mxu0 0.0
        %1759 = vmatpush1.msra.mxu0 0.0
        %1760 = vmatprep.subr.mxu0 0.0
        %1761 = vmatpush1.msra.mxu0 0.0
        %1762 = vmatprep.subr.mxu0 0.0
        %1763 = vmatpush1.msra.mxu0 0.0
        %1764 = vmatprep.subr.mxu0 0.0
        %1765 = vmatpush1.msra.mxu0 0.0
        %1766 = vmatprep.subr.mxu0 0.0
        %1767 = vmatpush1.msra.mxu0 0.0
        %1768 = vmatprep.mubr.f32.mxu0 0.0
        %1769 = vmatmul.mubr.f32.gmra.mrb[0].mxu0 %v1702
        %v1770 = vpop.f32.mrb[0].mxu0
        %v1771 = vadd.f32 %v1667, %v1770
        %v1772 = vpop.f32.mrb[0].mxu0
        %1773 = vdwg.mxu0
        %1774 = vst.msk [vmem:[%s290] sm:$0xff] %vm466, %v1771
        %s1775 = sand.u32 %s185, 1
        %s1776 = scalar_lea.sflag [#allocation6], %s1775
        %s1777 = sand.u32 %s185, 1
        %s1778 = smul.addr %s1777, 8
        %s1779 = scalar_lea.vmem [#allocation5], %s1778
        // Predicated region
        $region49: #{tpu_custom_call.1} parent=43 // pred_check
          %p1780 = pneg %p195
        $region50: #{tpu_custom_call.1} parent=43 // pred_check_branch
          %1782 = sbr.rel (%p1780) target = $region52
        $region51: #{tpu_custom_call.1} parent=43 // pred_region
          %s1784 = ssub.s32 128, 128
          %1785 = vsyncadd %s1776, %s1784
          %s1786 = sadd.s32 %s25, %s24
          %s1787 = smul.addr %s1786, 128
          %s1788 = scalar_lea.hbm %s6, %s1787
          %s1790 = sshll.u32 %s1779, 4
          %s1791 = int_to_ptr.vmem [resolvable:$true] %s1790
          %1793 = dma.vmem_to_hbm [thread:$0]  %s1791, 128, %s1788, %s1776
        $region52: #{tpu_custom_call.1} parent=43 // pred_fallthru
          _
      $region44: #{tpu_custom_call.1} parent=5 // pred_fallthru
        _
      %p1794 = scmp.le.s32.totalorder 2, %s15
      // Predicated region
      $region53: #{tpu_custom_call.1} parent=5 // pred_check
        %p1795 = pneg %p1794
      $region54: #{tpu_custom_call.1} parent=5 // pred_check_branch
        %1797 = sbr.rel (%p1795) target = $region56
      $region55: #{tpu_custom_call.1} parent=5 // pred_region
        %s1798 = ssub.s32 %s15, 2
        // Predicated region
        $region57: #{tpu_custom_call.1} parent=55 // pred_check
          %p1799 = pneg %p201
        $region58: #{tpu_custom_call.1} parent=55 // pred_check_branch
          %1801 = sbr.rel (%p1799) target = $region60
        $region59: #{tpu_custom_call.1} parent=55 // pred_region
          %s1802 = sand.u32 %s186, 1
          %s1803 = scalar_lea.sflag [#allocation6], %s1802
          %s1804 = sand.u32 %s186, 1
          %s1805 = smul.addr %s1804, 8
          %s1806 = scalar_lea.vmem [#allocation5], %s1805
          %1807 = dma.done %s1803, 128
        $region60: #{tpu_custom_call.1} parent=55 // pred_fallthru
          _
      $region56: #{tpu_custom_call.1} parent=5 // pred_fallthru
        _
    $region6: #{tpu_custom_call.1} parent=1 // loop_footer
      %s19 = sadd.s32 1, %s15
    $region7: #{tpu_custom_call.1} parent=1 // loop_footer_branch
      %14 = sbr.rel target = $region3
    $region8: #{tpu_custom_call.1} parent=1 // loop_exit
      _
    %1808 = vsyncpa [#allocation6], 1
    %s1809 = scalar_lea.sflag [#allocation6], 1
    %1810 = vsyncpa %s1809, 1

</llo_original>
